<compile_context>
chip_gen: v7x
topology: tpu7x:2x2x1
jax: 0.10.0
libtpu: 0.0.40
codegen_flags: <defaults>
</compile_context>

<pallas_src>
import jax
import jax.numpy as jnp
from jax.experimental import pallas as pl
from jax.experimental.pallas import tpu as pltpu

IMG_FEATURES = 32 * 32 * 3   # 3072
LANE = 128

_STEP_OVERHEAD_ROWS = 64     # ~0.35 us per grid step, in f32-x-row DMA units
_N_CORES = 2                 # v7x megacore; harmless on single-TC chips


def _round_up(x, m):
    return (x + m - 1) // m * m


def _cdiv(a, b):
    return -(-a // b)


# ----------------------------- Pallas kernel ------------------------------ #
def elm_kernel(x_ref, w1_ref, b1_ref, w2_ref, b2_ref, w3_ref, b3_ref, o_ref):
    # x tile: (TILE_M, 3072); f32 or bf16 input (no-op cast if already bf16).
    x = x_ref[...].astype(jnp.bfloat16)

    # layer 1: orth projection folded into the first FC weights
    # (bf16 x bf16, f32 accumulate) + bias + ReLU.
    h = jnp.dot(x, w1_ref[...], preferred_element_type=jnp.float32) + b1_ref[...]
    h = jnp.maximum(h, 0.0).astype(jnp.bfloat16)

    # layer 2 (hidden1): Linear + ReLU.
    h = jnp.dot(h, w2_ref[...], preferred_element_type=jnp.float32) + b2_ref[...]
    h = jnp.maximum(h, 0.0).astype(jnp.bfloat16)

    # final: Linear, output padded to 128 lanes for a lane-dense store.
    o_ref[...] = (jnp.dot(h, w3_ref[...], preferred_element_type=jnp.float32)
                  + b3_ref[...])


# --------------------------- param preparation ----------------------------- #
def prepare_params(params):
    """Fold orth into w1 (in fp32), cast weights to bf16, pad final layer."""
    orth = params["orth"].astype(jnp.float32)
    w1f = jnp.dot(orth, params["w1"].astype(jnp.float32)).astype(jnp.bfloat16)

    num_classes = params["w3"].shape[1]
    width = params["w3"].shape[0]
    n_pad = _round_up(num_classes, LANE)

    w3_pad = jnp.zeros((width, n_pad), jnp.float32)
    w3_pad = w3_pad.at[:, :num_classes].set(params["w3"].astype(jnp.float32))
    b3_pad = jnp.zeros((1, n_pad), jnp.float32)
    b3_pad = b3_pad.at[:, :num_classes].set(params["b3"].astype(jnp.float32))

    return dict(
        w1=w1f,
        b1=params["b1"].astype(jnp.float32),
        w2=params["w2"].astype(jnp.bfloat16),
        b2=params["b2"].astype(jnp.float32),
        w3=w3_pad.astype(jnp.bfloat16),
        b3=b3_pad,
        num_classes=num_classes,   # plain python int (static)
    )


# ------------------------------ tile chooser -------------------------------- #
def _choose_tile_m(batch, cap=512):
    """Batch tile: large enough to amortize per-step overhead, but keep >=2
    grid steps (both v7x TensorCores busy) and low padded-row waste."""
    b8 = _round_up(batch, 8)
    cap = min(cap, b8)

    def cost(tm):
        steps = _cdiv(b8, tm)
        serial = _cdiv(steps, _N_CORES)                 # per-core serial steps
        collapse = (steps == 1) and (b8 > 8)            # would idle a v7x core
        return (collapse, serial * (tm + _STEP_OVERHEAD_ROWS), -tm)

    return min(range(8, cap + 1, 8), key=cost)


# ------------------------------- wrapper ----------------------------------- #
def elm_cifar_forward(x_nchw, prep):
    """x_nchw: (B, 3, 32, 32), float32 or bfloat16.  Returns (B, classes) f32.

    Pass bf16 (or pre-normalized narrow) pixels straight from the data
    pipeline when possible -- it halves the HBM-bound x stream.  Do NOT add a
    standalone f32->bf16 cast right before this call; it round-trips HBM.
    """
    B = x_nchw.shape[0]
    x_flat = x_nchw.reshape(B, IMG_FEATURES)           # glue reshape (plain JAX)

    w1, b1, w2, b2, w3, b3 = (prep["w1"], prep["b1"], prep["w2"], prep["b2"],
                              prep["w3"], prep["b3"])
    num_classes = prep["num_classes"]
    n_pad = w3.shape[1]

    tile_m = _choose_tile_m(B)
    steps = _cdiv(_round_up(B, 8), tile_m)
    b_pad = steps * tile_m
    if b_pad != B:
        x_flat = jnp.pad(x_flat, ((0, b_pad - B), (0, 0)))

    # VMEM budget: double-buffered x/out blocks + resident weight blocks +
    # the in-kernel bf16 x temporary.  Keeps double-buffering intact on v5e
    # (16 MiB default scoped) and stays within v7x's 64 MiB physical VMEM.
    x_bytes = x_flat.dtype.itemsize
    weight_bytes = sum(int(a.size) * a.dtype.itemsize
                       for a in (w1, b1, w2, b2, w3, b3))
    est = (2 * tile_m * IMG_FEATURES * x_bytes     # x double buffer
           + 2 * tile_m * n_pad * 4                # out double buffer
           + 2 * weight_bytes                      # const weight blocks
           + tile_m * IMG_FEATURES * 2             # in-kernel bf16 x temp
           + (2 << 20))                            # misc headroom
    vmem_limit = int(min(max(est, 32 << 20), 64 << 20))

    const = lambda shape: pl.BlockSpec(shape, lambda i: (0, 0))

    out = pl.pallas_call(
        elm_kernel,
        out_shape=jax.ShapeDtypeStruct((b_pad, n_pad), jnp.float32),
        grid=(steps,),
        in_specs=[
            pl.BlockSpec((tile_m, IMG_FEATURES), lambda i: (i, 0)),
            const(w1.shape), const(b1.shape),
            const(w2.shape), const(b2.shape),
            const(w3.shape), const(b3.shape),
        ],
        out_specs=pl.BlockSpec((tile_m, n_pad), lambda i: (i, 0)),
        compiler_params=pltpu.CompilerParams(
            dimension_semantics=("parallel",),
            vmem_limit_bytes=vmem_limit),
    )(x_flat, w1, b1, w2, b2, w3, b3)

    return out[:B, :num_classes]


# -------------------------- deterministic params --------------------------- #
def init_params(key, emb, width, num_classes):
    k_orth, k1, k2, k3 = jax.random.split(key, 4)

    # torch.nn.init.orthogonal_(torch.empty(3072, emb)) -> QR of a Gaussian.
    g = jax.random.normal(k_orth, (IMG_FEATURES, emb), dtype=jnp.float32)
    orth, _ = jnp.linalg.qr(g)

    def linear(k, fan_in, fan_out):
        kw, kb = jax.random.split(k)
        bound = 1.0 / jnp.sqrt(fan_in)
        w = jax.random.uniform(kw, (fan_in, fan_out), jnp.float32, -bound, bound)
        b = jax.random.uniform(kb, (1, fan_out), jnp.float32, -bound, bound)
        return w, b

    w1, b1 = linear(k1, emb, width)
    w2, b2 = linear(k2, width, width)
    w3, b3 = linear(k3, width, num_classes)
    return dict(orth=orth, w1=w1, b1=b1, w2=w2, b2=b2, w3=w3, b3=b3)


# --------------------------------- main ------------------------------------ #
if __name__ == "__main__":
    EMB, WIDTH, NUM_CLASSES, BATCH = 128, 128, 10, 24

    key = jax.random.PRNGKey(0)
    k_x, k_p = jax.random.split(key)

    x = jax.random.normal(k_x, (BATCH, 3, 32, 32), dtype=jnp.float32)
    params = init_params(k_p, EMB, WIDTH, NUM_CLASSES)
    prep = prepare_params(params)

    out = elm_cifar_forward(x, prep)
    jax.block_until_ready(out)

    assert out.shape == (BATCH, NUM_CLASSES), out.shape
    assert out.dtype == jnp.float32

    # Pure-JAX reference faithful to the torch module's math (low-precision
    # orth projection, then fp32 linears + ReLU).  The folded / bf16-weight
    # kernel differs only by low-order rounding.
    xf = x.reshape(BATCH, -1)
    h = jnp.dot(xf.astype(jnp.bfloat16), params["orth"].astype(jnp.bfloat16),
                preferred_element_type=jnp.float32)
    h = jnp.maximum(h @ params["w1"] + params["b1"], 0.0)
    h = jnp.maximum(h @ params["w2"] + params["b2"], 0.0)
    ref = h @ params["w3"] + params["b3"]

    max_err = float(jnp.max(jnp.abs(out - ref)))
    assert jnp.allclose(out, ref, atol=5e-2, rtol=5e-2), max_err

    print("KERNEL_OK")
</pallas_src>

<mosaic_0001>
module attributes {stable_mosaic.version = 11 : i64} {
  func.func @elm_kernel(%arg0: i32, %arg1: memref<16x3072xf32, #tpu.memory_space<vmem>>, %arg2: memref<3072x128xbf16, #tpu.memory_space<vmem>>, %arg3: memref<1x128xf32, #tpu.memory_space<vmem>>, %arg4: memref<128x128xbf16, #tpu.memory_space<vmem>>, %arg5: memref<1x128xf32, #tpu.memory_space<vmem>>, %arg6: memref<128x128xbf16, #tpu.memory_space<vmem>>, %arg7: memref<1x128xf32, #tpu.memory_space<vmem>>, %arg8: memref<16x128xf32, #tpu.memory_space<vmem>>) attributes {dimension_semantics = [#tpu.dimension_semantics<parallel>], iteration_bounds = array<i64: 2>, scalar_prefetch = 0 : i64, scratch_operands = 0 : i64, tpu.core_type = #tpu.core_type<tc>, window_params = [{transform_indices = @transform_0, window_bounds = array<i64: 16, 3072>}, {pipeline_mode = #tpu.pipeline_mode<synchronous>, transform_indices = @transform_1, window_bounds = array<i64: 3072, 128>}, {pipeline_mode = #tpu.pipeline_mode<synchronous>, transform_indices = @transform_2, window_bounds = array<i64: 1, 128>}, {pipeline_mode = #tpu.pipeline_mode<synchronous>, transform_indices = @transform_3, window_bounds = array<i64: 128, 128>}, {pipeline_mode = #tpu.pipeline_mode<synchronous>, transform_indices = @transform_4, window_bounds = array<i64: 1, 128>}, {pipeline_mode = #tpu.pipeline_mode<synchronous>, transform_indices = @transform_5, window_bounds = array<i64: 128, 128>}, {pipeline_mode = #tpu.pipeline_mode<synchronous>, transform_indices = @transform_6, window_bounds = array<i64: 1, 128>}, {transform_indices = @transform_7, window_bounds = array<i64: 16, 128>}]} {
    %c0 = arith.constant 0 : index
    %c0_0 = arith.constant 0 : index
    %0 = vector.load %arg1[%c0, %c0_0] : memref<16x3072xf32, #tpu.memory_space<vmem>>, vector<16x3072xf32>
    %1 = arith.truncf %0 : vector<16x3072xf32> to vector<16x3072xbf16>
    %c0_1 = arith.constant 0 : index
    %c0_2 = arith.constant 0 : index
    %2 = vector.load %arg2[%c0_1, %c0_2] : memref<3072x128xbf16, #tpu.memory_space<vmem>>, vector<3072x128xbf16>
    %cst = arith.constant dense<0.000000e+00> : vector<16x128xf32>
    %3 = tpu.matmul %1, %2, %cst {dimension_numbers = #tpu.dot_dimension_numbers<[1], [0], [0], [1], [0, 0, 1, 1], [], []>} : vector<16x3072xbf16>, vector<3072x128xbf16>, vector<16x128xf32> -> vector<16x128xf32>
    %c0_3 = arith.constant 0 : index
    %c0_4 = arith.constant 0 : index
    %4 = vector.load %arg3[%c0_3, %c0_4] : memref<1x128xf32, #tpu.memory_space<vmem>>, vector<1x128xf32>
    %5 = vector.broadcast %4 : vector<1x128xf32> to vector<16x128xf32>
    %6 = arith.addf %3, %5 : vector<16x128xf32>
    %cst_5 = arith.constant 0.000000e+00 : f32
    %7 = vector.broadcast %cst_5 : f32 to vector<16x128xf32>
    %8 = arith.maximumf %6, %7 : vector<16x128xf32>
    %9 = arith.truncf %8 : vector<16x128xf32> to vector<16x128xbf16>
    %c0_6 = arith.constant 0 : index
    %c0_7 = arith.constant 0 : index
    %10 = vector.load %arg4[%c0_6, %c0_7] : memref<128x128xbf16, #tpu.memory_space<vmem>>, vector<128x128xbf16>
    %cst_8 = arith.constant dense<0.000000e+00> : vector<16x128xf32>
    %11 = tpu.matmul %9, %10, %cst_8 {dimension_numbers = #tpu.dot_dimension_numbers<[1], [0], [0], [1], [0, 0, 1, 1], [], []>} : vector<16x128xbf16>, vector<128x128xbf16>, vector<16x128xf32> -> vector<16x128xf32>
    %c0_9 = arith.constant 0 : index
    %c0_10 = arith.constant 0 : index
    %12 = vector.load %arg5[%c0_9, %c0_10] : memref<1x128xf32, #tpu.memory_space<vmem>>, vector<1x128xf32>
    %13 = vector.broadcast %12 : vector<1x128xf32> to vector<16x128xf32>
    %14 = arith.addf %11, %13 : vector<16x128xf32>
    %cst_11 = arith.constant 0.000000e+00 : f32
    %15 = vector.broadcast %cst_11 : f32 to vector<16x128xf32>
    %16 = arith.maximumf %14, %15 : vector<16x128xf32>
    %17 = arith.truncf %16 : vector<16x128xf32> to vector<16x128xbf16>
    %c0_12 = arith.constant 0 : index
    %c0_13 = arith.constant 0 : index
    %18 = vector.load %arg6[%c0_12, %c0_13] : memref<128x128xbf16, #tpu.memory_space<vmem>>, vector<128x128xbf16>
    %cst_14 = arith.constant dense<0.000000e+00> : vector<16x128xf32>
    %19 = tpu.matmul %17, %18, %cst_14 {dimension_numbers = #tpu.dot_dimension_numbers<[1], [0], [0], [1], [0, 0, 1, 1], [], []>} : vector<16x128xbf16>, vector<128x128xbf16>, vector<16x128xf32> -> vector<16x128xf32>
    %c0_15 = arith.constant 0 : index
    %c0_16 = arith.constant 0 : index
    %20 = vector.load %arg7[%c0_15, %c0_16] : memref<1x128xf32, #tpu.memory_space<vmem>>, vector<1x128xf32>
    %21 = vector.broadcast %20 : vector<1x128xf32> to vector<16x128xf32>
    %22 = arith.addf %19, %21 : vector<16x128xf32>
    %c0_17 = arith.constant 0 : index
    %c0_18 = arith.constant 0 : index
    %23 = vector.load %arg8[%c0_17, %c0_18] : memref<16x128xf32, #tpu.memory_space<vmem>>, vector<16x128xf32>
    tpu.vector_store %arg8[%c0_17, %c0_18], %22 {strides = array<i32>} : memref<16x128xf32, #tpu.memory_space<vmem>>, vector<16x128xf32>,
    return
  }
  func.func @transform_0(%arg0: i32) -> (i32, i32) {
    %c0_i32 = arith.constant 0 : i32
    %c0_i32_0 = arith.constant 0 : i32
    return %arg0, %c0_i32 : i32, i32
  }
  func.func @transform_1(%arg0: i32) -> (i32, i32) {
    %c0_i32 = arith.constant 0 : i32
    %c0_i32_0 = arith.constant 0 : i32
    %c0_i32_1 = arith.constant 0 : i32
    return %c0_i32, %c0_i32_0 : i32, i32
  }
  func.func @transform_2(%arg0: i32) -> (i32, i32) {
    %c0_i32 = arith.constant 0 : i32
    %c0_i32_0 = arith.constant 0 : i32
    %c0_i32_1 = arith.constant 0 : i32
    return %c0_i32, %c0_i32_0 : i32, i32
  }
  func.func @transform_3(%arg0: i32) -> (i32, i32) {
    %c0_i32 = arith.constant 0 : i32
    %c0_i32_0 = arith.constant 0 : i32
    %c0_i32_1 = arith.constant 0 : i32
    return %c0_i32, %c0_i32_0 : i32, i32
  }
  func.func @transform_4(%arg0: i32) -> (i32, i32) {
    %c0_i32 = arith.constant 0 : i32
    %c0_i32_0 = arith.constant 0 : i32
    %c0_i32_1 = arith.constant 0 : i32
    return %c0_i32, %c0_i32_0 : i32, i32
  }
  func.func @transform_5(%arg0: i32) -> (i32, i32) {
    %c0_i32 = arith.constant 0 : i32
    %c0_i32_0 = arith.constant 0 : i32
    %c0_i32_1 = arith.constant 0 : i32
    return %c0_i32, %c0_i32_0 : i32, i32
  }
  func.func @transform_6(%arg0: i32) -> (i32, i32) {
    %c0_i32 = arith.constant 0 : i32
    %c0_i32_0 = arith.constant 0 : i32
    %c0_i32_1 = arith.constant 0 : i32
    return %c0_i32, %c0_i32_0 : i32, i32
  }
  func.func @transform_7(%arg0: i32) -> (i32, i32) {
    %c0_i32 = arith.constant 0 : i32
    %c0_i32_0 = arith.constant 0 : i32
    return %arg0, %c0_i32 : i32, i32
  }
}

</mosaic_0001>

<llo_original>
// kernel: tpu_custom_call.1
$region0: #{tpu_custom_call.1}
  #allocation0 [shape = 'u32[]', space=smem, size = 0x4, offset = 0x4, fixed_abs, tag = 'smem constant byte address 0x4 - core index']
  #allocation1 [shape = 'u32[144,128]{1,0:T(1,128)}', space=vmem, size = 0x12000, scoped, tag = 'internal scratch']
  %s0 = inlined_call_operand.hbm [shape: f32[32,3072], index: 0, kind: input, shape index: {}]
  %s1 = inlined_call_operand.hbm [shape: bf16[3072,128], index: 1, kind: input, shape index: {}]
  %s2 = inlined_call_operand.vmem [shape: f32[1,128], index: 2, kind: input, shape index: {}]
  %s3 = inlined_call_operand.hbm [shape: bf16[128,128], index: 3, kind: input, shape index: {}]
  %s4 = inlined_call_operand.vmem [shape: f32[1,128], index: 4, kind: input, shape index: {}]
  %s5 = inlined_call_operand.hbm [shape: bf16[128,128], index: 5, kind: input, shape index: {}]
  %s6 = inlined_call_operand.vmem [shape: f32[1,128], index: 6, kind: input, shape index: {}]
  %s7 = inlined_call_operand.hbm [shape: f32[32,128], index: 7, kind: output, shape index: {}]
  %s8 = sld [smem:[#allocation0]]
  $region77: #{tpu_custom_call.1} parent=0
    _
  %s10 = ssub.s32 1, %s8
  %s11 = scalar_select 0, %s10, %s8
  $region1: #{tpu_custom_call.1} parent=0
    #allocation2 [shape = 'u8[393216]{0}', space=vmem, size = 0x60000, scoped, tag = 'input window, operand 0']
    #allocation3 [shape = 's32[2]{0}', space=sflag, size = 0x8, scoped, tag = 'scoped memory for tpu_custom_call.1']
    #allocation4 [shape = 's32[2]{0}', space=sflag, size = 0x8, scoped, tag = 'scoped memory for tpu_custom_call.1']
    #allocation5 [shape = 'u8[786432]{0}', space=vmem, size = 0xc0000, scoped, tag = 'input window, operand 1, single buffered']
    #allocation6 [shape = 's32[1]{0}', space=sflag, size = 0x4, scoped, tag = 'scoped memory for tpu_custom_call.1']
    #allocation7 [shape = 'u8[32768]{0}', space=vmem, size = 0x8000, scoped, tag = 'input window, operand 3, single buffered']
    #allocation8 [shape = 'u8[32768]{0}', space=vmem, size = 0x8000, scoped, tag = 'input window, operand 5, single buffered']
    #allocation9 [shape = 's32[1]{0}', space=sflag, size = 0x4, scoped, tag = 'scoped memory for tpu_custom_call.1']
    #allocation10 [shape = 'u8[16384]{0}', space=vmem, size = 0x4000, scoped, tag = 'output window, operand 0']
    %12 = vsyncpa [#allocation3], 0
    %s13 = scalar_lea.sflag [#allocation3], 1
    %14 = vsyncpa %s13, 0
    %15 = vsyncpa [#allocation6], 0
    %16 = vsyncpa [#allocation9], 0
    %17 = vsyncpa [#allocation4], 0
    %s18 = scalar_lea.sflag [#allocation4], 1
    %19 = vsyncpa %s18, 0
    loop: start=0, step=1, limit=4
    $region2: #{tpu_custom_call.1} parent=1 // loop_pre_header
      _
    $region3: #{tpu_custom_call.1} parent=1 // loop_header
      %s21 = sphi 0, %s25
      %p22 = scmp.ge.s32.totalorder %s21, 4
      %s31 = sphi 0, %s33
      %s34 = sphi 0, %s31
      %s35 = sphi 0, %s34
      %s51 = sphi 0, %s35
      %s55 = sphi 0, %s55
      %s57 = sphi 0, %s55
      %s58 = sphi 0, %s57
      %s72 = sphi 0, %s58
      %s76 = sphi 0, %s76
      %s78 = sphi 0, %s76
      %s79 = sphi 0, %s78
      %s93 = sphi 0, %s79
      %s97 = sphi 0, %s97
      %s99 = sphi 0, %s97
      %s100 = sphi 0, %s99
      %s114 = sphi 0, %s100
      %s118 = sphi 0, %s118
      %s120 = sphi 0, %s118
      %s121 = sphi 0, %s120
      %s135 = sphi 0, %s121
      %s139 = sphi 0, %s139
      %s141 = sphi 0, %s139
      %s142 = sphi 0, %s141
      %s156 = sphi 0, %s142
      %s160 = sphi 0, %s160
      %s162 = sphi 0, %s160
      %s163 = sphi 0, %s162
      %s177 = sphi 0, %s163
      %s183 = sphi 0, %s185
      %s186 = sphi 0, %s183
      %s187 = sphi 0, %s186
      %s203 = sphi 0, %s187
    $region4: #{tpu_custom_call.1} parent=1 // loop_header_branch
      %24 = sbr.rel (%p22) target = $region8
    $region5: #{tpu_custom_call.1} parent=1 // loop_body
      %s26 = ssub.s32 %s21, 1
      %s27 = ssub.s32 %s21, 2
      %s28 = sadd.s32 %s21, 1
      %s29 = ssub.s32 %s21, %s28
      %p30 = scmp.eq.s32.totalorder %s29, 0
      %s32 = sadd.s32 %s31, 1
      %s33 = scalar_select %p30, %s31, %s32
      %p36 = pneg %p30
      %p37 = scmp.eq.s32.totalorder %s21, 1
      %p38 = por %p36, %p37
      %p39 = scmp.ne.s32.totalorder %s31, %s34
      %p40 = scmp.eq.s32.totalorder %s21, 0
      %p41 = por %p39, %p40
      %p42 = scmp.ne.s32.totalorder %s31, %s34
      %p43 = scmp.eq.s32.totalorder %s26, 1
      %p44 = por %p42, %p43
      %p45 = scmp.ne.s32.totalorder %s34, %s35
      %p46 = scmp.eq.s32.totalorder %s26, 0
      %p47 = por %p45, %p46
      %p48 = scmp.ne.s32.totalorder %s34, %s35
      %p49 = scmp.eq.s32.totalorder %s27, 1
      %p50 = por %p48, %p49
      %p52 = scmp.ne.s32.totalorder %s35, %s51
      %p53 = scmp.eq.s32.totalorder %s27, 0
      %p54 = por %p52, %p53
      %s56 = sadd.s32 %s55, 1
      %p59 = scmp.eq.s32.totalorder %s21, 1
      %p60 = scmp.ne.s32.totalorder %s55, %s57
      %p61 = scmp.eq.s32.totalorder %s21, 0
      %p62 = por %p60, %p61
      %p63 = scmp.ne.s32.totalorder %s55, %s57
      %p64 = scmp.eq.s32.totalorder %s26, 1
      %p65 = por %p63, %p64
      %p66 = scmp.ne.s32.totalorder %s57, %s58
      %p67 = scmp.eq.s32.totalorder %s26, 0
      %p68 = por %p66, %p67
      %p69 = scmp.ne.s32.totalorder %s57, %s58
      %p70 = scmp.eq.s32.totalorder %s27, 1
      %p71 = por %p69, %p70
      %p73 = scmp.ne.s32.totalorder %s58, %s72
      %p74 = scmp.eq.s32.totalorder %s27, 0
      %p75 = por %p73, %p74
      %s77 = sadd.s32 %s76, 1
      %p80 = scmp.eq.s32.totalorder %s21, 1
      %p81 = scmp.ne.s32.totalorder %s76, %s78
      %p82 = scmp.eq.s32.totalorder %s21, 0
      %p83 = por %p81, %p82
      %p84 = scmp.ne.s32.totalorder %s76, %s78
      %p85 = scmp.eq.s32.totalorder %s26, 1
      %p86 = por %p84, %p85
      %p87 = scmp.ne.s32.totalorder %s78, %s79
      %p88 = scmp.eq.s32.totalorder %s26, 0
      %p89 = por %p87, %p88
      %p90 = scmp.ne.s32.totalorder %s78, %s79
      %p91 = scmp.eq.s32.totalorder %s27, 1
      %p92 = por %p90, %p91
      %p94 = scmp.ne.s32.totalorder %s79, %s93
      %p95 = scmp.eq.s32.totalorder %s27, 0
      %p96 = por %p94, %p95
      %s98 = sadd.s32 %s97, 1
      %p101 = scmp.eq.s32.totalorder %s21, 1
      %p102 = scmp.ne.s32.totalorder %s97, %s99
      %p103 = scmp.eq.s32.totalorder %s21, 0
      %p104 = por %p102, %p103
      %p105 = scmp.ne.s32.totalorder %s97, %s99
      %p106 = scmp.eq.s32.totalorder %s26, 1
      %p107 = por %p105, %p106
      %p108 = scmp.ne.s32.totalorder %s99, %s100
      %p109 = scmp.eq.s32.totalorder %s26, 0
      %p110 = por %p108, %p109
      %p111 = scmp.ne.s32.totalorder %s99, %s100
      %p112 = scmp.eq.s32.totalorder %s27, 1
      %p113 = por %p111, %p112
      %p115 = scmp.ne.s32.totalorder %s100, %s114
      %p116 = scmp.eq.s32.totalorder %s27, 0
      %p117 = por %p115, %p116
      %s119 = sadd.s32 %s118, 1
      %p122 = scmp.eq.s32.totalorder %s21, 1
      %p123 = scmp.ne.s32.totalorder %s118, %s120
      %p124 = scmp.eq.s32.totalorder %s21, 0
      %p125 = por %p123, %p124
      %p126 = scmp.ne.s32.totalorder %s118, %s120
      %p127 = scmp.eq.s32.totalorder %s26, 1
      %p128 = por %p126, %p127
      %p129 = scmp.ne.s32.totalorder %s120, %s121
      %p130 = scmp.eq.s32.totalorder %s26, 0
      %p131 = por %p129, %p130
      %p132 = scmp.ne.s32.totalorder %s120, %s121
      %p133 = scmp.eq.s32.totalorder %s27, 1
      %p134 = por %p132, %p133
      %p136 = scmp.ne.s32.totalorder %s121, %s135
      %p137 = scmp.eq.s32.totalorder %s27, 0
      %p138 = por %p136, %p137
      %s140 = sadd.s32 %s139, 1
      %p143 = scmp.eq.s32.totalorder %s21, 1
      %p144 = scmp.ne.s32.totalorder %s139, %s141
      %p145 = scmp.eq.s32.totalorder %s21, 0
      %p146 = por %p144, %p145
      %p147 = scmp.ne.s32.totalorder %s139, %s141
      %p148 = scmp.eq.s32.totalorder %s26, 1
      %p149 = por %p147, %p148
      %p150 = scmp.ne.s32.totalorder %s141, %s142
      %p151 = scmp.eq.s32.totalorder %s26, 0
      %p152 = por %p150, %p151
      %p153 = scmp.ne.s32.totalorder %s141, %s142
      %p154 = scmp.eq.s32.totalorder %s27, 1
      %p155 = por %p153, %p154
      %p157 = scmp.ne.s32.totalorder %s142, %s156
      %p158 = scmp.eq.s32.totalorder %s27, 0
      %p159 = por %p157, %p158
      %s161 = sadd.s32 %s160, 1
      %p164 = scmp.eq.s32.totalorder %s21, 1
      %p165 = scmp.ne.s32.totalorder %s160, %s162
      %p166 = scmp.eq.s32.totalorder %s21, 0
      %p167 = por %p165, %p166
      %p168 = scmp.ne.s32.totalorder %s160, %s162
      %p169 = scmp.eq.s32.totalorder %s26, 1
      %p170 = por %p168, %p169
      %p171 = scmp.ne.s32.totalorder %s162, %s163
      %p172 = scmp.eq.s32.totalorder %s26, 0
      %p173 = por %p171, %p172
      %p174 = scmp.ne.s32.totalorder %s162, %s163
      %p175 = scmp.eq.s32.totalorder %s27, 1
      %p176 = por %p174, %p175
      %p178 = scmp.ne.s32.totalorder %s163, %s177
      %p179 = scmp.eq.s32.totalorder %s27, 0
      %p180 = por %p178, %p179
      %s181 = ssub.s32 %s21, %s28
      %p182 = scmp.eq.s32.totalorder %s181, 0
      %s184 = sadd.s32 %s183, 1
      %s185 = scalar_select %p182, %s183, %s184
      %p188 = pneg %p182
      %p189 = scmp.eq.s32.totalorder %s21, 1
      %p190 = por %p188, %p189
      %p191 = scmp.ne.s32.totalorder %s183, %s186
      %p192 = scmp.eq.s32.totalorder %s21, 0
      %p193 = por %p191, %p192
      %p194 = scmp.ne.s32.totalorder %s183, %s186
      %p195 = scmp.eq.s32.totalorder %s26, 1
      %p196 = por %p194, %p195
      %p197 = scmp.ne.s32.totalorder %s186, %s187
      %p198 = scmp.eq.s32.totalorder %s26, 0
      %p199 = por %p197, %p198
      %p200 = scmp.ne.s32.totalorder %s186, %s187
      %p201 = scmp.eq.s32.totalorder %s27, 1
      %p202 = por %p200, %p201
      %p204 = scmp.ne.s32.totalorder %s187, %s203
      %p205 = scmp.eq.s32.totalorder %s27, 0
      %p206 = por %p204, %p205
      %p207 = scmp.le.s32.totalorder 1, %s21
      %p208 = scmp.lt.s32.totalorder %s21, 3
      %p209 = pnand %p207, %p208
      %p210 = pneg %p209
      // Predicated region
      $region9: #{tpu_custom_call.1} parent=5 // pred_check
        _
      $region10: #{tpu_custom_call.1} parent=5 // pred_check_branch
        %212 = sbr.rel (%p209) target = $region12
      $region11: #{tpu_custom_call.1} parent=5 // pred_region
        %s213 = ssub.s32 %s21, 1
        // Predicated region
        $region13: #{tpu_custom_call.1} parent=11 // pred_check
          %p214 = pneg %p68
        $region14: #{tpu_custom_call.1} parent=11 // pred_check_branch
          %216 = sbr.rel (%p214) target = $region16
        $region15: #{tpu_custom_call.1} parent=11 // pred_region
          %s218 = ssub.s32 24576, 24576
          %219 = vsyncadd [#allocation6], %s218
          %s220 = sshll.u32 [#allocation5], 4
          %s221 = int_to_ptr.vmem [resolvable:$true] %s220
          %226 = dma.hbm_to_vmem [thread:$0]  %s1, 24576, %s221, [#allocation6], 64, 64, 4
        $region16: #{tpu_custom_call.1} parent=11 // pred_fallthru
          _
        // Predicated region
        $region17: #{tpu_custom_call.1} parent=11 // pred_check
          %p227 = pneg %p89
        $region18: #{tpu_custom_call.1} parent=11 // pred_check_branch
          %229 = sbr.rel (%p227) target = $region20
        $region19: #{tpu_custom_call.1} parent=11 // pred_region
          _
        $region20: #{tpu_custom_call.1} parent=11 // pred_fallthru
          _
        // Predicated region
        $region21: #{tpu_custom_call.1} parent=11 // pred_check
          %p230 = pneg %p110
        $region22: #{tpu_custom_call.1} parent=11 // pred_check_branch
          %232 = sbr.rel (%p230) target = $region24
        $region23: #{tpu_custom_call.1} parent=11 // pred_region
          %s234 = ssub.s32 1024, 1024
          %235 = vsyncadd [#allocation6], %s234
          %s236 = sshll.u32 [#allocation7], 4
          %s237 = int_to_ptr.vmem [resolvable:$true] %s236
          %242 = dma.hbm_to_vmem [thread:$0]  %s3, 1024, %s237, [#allocation6], 64, 64, 4
        $region24: #{tpu_custom_call.1} parent=11 // pred_fallthru
          _
        // Predicated region
        $region25: #{tpu_custom_call.1} parent=11 // pred_check
          %p243 = pneg %p131
        $region26: #{tpu_custom_call.1} parent=11 // pred_check_branch
          %245 = sbr.rel (%p243) target = $region28
        $region27: #{tpu_custom_call.1} parent=11 // pred_region
          _
        $region28: #{tpu_custom_call.1} parent=11 // pred_fallthru
          _
        // Predicated region
        $region29: #{tpu_custom_call.1} parent=11 // pred_check
          %p246 = pneg %p152
        $region30: #{tpu_custom_call.1} parent=11 // pred_check_branch
          %248 = sbr.rel (%p246) target = $region32
        $region31: #{tpu_custom_call.1} parent=11 // pred_region
          %s250 = ssub.s32 1024, 1024
          %251 = vsyncadd [#allocation9], %s250
          %s252 = sshll.u32 [#allocation8], 4
          %s253 = int_to_ptr.vmem [resolvable:$true] %s252
          %258 = dma.hbm_to_vmem [thread:$0]  %s5, 1024, %s253, [#allocation9], 64, 64, 4
        $region32: #{tpu_custom_call.1} parent=11 // pred_fallthru
          _
        // Predicated region
        $region33: #{tpu_custom_call.1} parent=11 // pred_check
          %p259 = pneg %p173
        $region34: #{tpu_custom_call.1} parent=11 // pred_check_branch
          %261 = sbr.rel (%p259) target = $region36
        $region35: #{tpu_custom_call.1} parent=11 // pred_region
          _
        $region36: #{tpu_custom_call.1} parent=11 // pred_fallthru
          _
      $region12: #{tpu_custom_call.1} parent=5 // pred_fallthru
        _
      %p262 = scmp.lt.s32.totalorder %s21, 2
      // Predicated region
      $region37: #{tpu_custom_call.1} parent=5 // pred_check
        %p263 = pneg %p262
      $region38: #{tpu_custom_call.1} parent=5 // pred_check_branch
        %265 = sbr.rel (%p263) target = $region40
      $region39: #{tpu_custom_call.1} parent=5 // pred_region
        // Predicated region
        $region41: #{tpu_custom_call.1} parent=39 // pred_check
          %p266 = pneg %p41
        $region42: #{tpu_custom_call.1} parent=39 // pred_check_branch
          %268 = sbr.rel (%p266) target = $region44
        $region43: #{tpu_custom_call.1} parent=39 // pred_region
          %s269 = sand.u32 %s31, 1
          %s270 = scalar_lea.sflag [#allocation3], %s269
          %s271 = sand.u32 %s31, 1
          %s272 = smul.addr %s271, 384
          %s273 = scalar_lea.vmem [#allocation2], %s272
          %s274 = smul.u32 2, %s21
          %s276 = ssub.s32 6144, 6144
          %277 = vsyncadd %s270, %s276
          %s278 = smul.addr %s274, 24
          %s279 = smul.addr %s278, 128
          %s280 = scalar_lea.hbm %s0, %s279
          %s281 = sshll.u32 %s273, 4
          %s282 = int_to_ptr.vmem [resolvable:$true] %s281
          %287 = dma.hbm_to_vmem [thread:$0]  %s280, 6144, %s282, %s270, 3072, 3072, 192
        $region44: #{tpu_custom_call.1} parent=39 // pred_fallthru
          _
      $region40: #{tpu_custom_call.1} parent=5 // pred_fallthru
        _
      %p288 = scmp.le.s32.totalorder 1, %s21
      %p289 = scmp.lt.s32.totalorder %s21, 3
      %p290 = pnand %p288, %p289
      %p291 = pneg %p290
      // Predicated region
      $region45: #{tpu_custom_call.1} parent=5 // pred_check
        _
      $region46: #{tpu_custom_call.1} parent=5 // pred_check_branch
        %293 = sbr.rel (%p290) target = $region48
      $region47: #{tpu_custom_call.1} parent=5 // pred_region
        %s294 = ssub.s32 %s21, 1
        %s295 = sand.u32 %s34, 1
        %s296 = scalar_lea.sflag [#allocation3], %s295
        %s297 = sand.u32 %s34, 1
        %s298 = smul.addr %s297, 384
        %s299 = scalar_lea.vmem [#allocation2], %s298
        // Predicated region
        $region49: #{tpu_custom_call.1} parent=47 // pred_check
          %p300 = pneg %p47
        $region50: #{tpu_custom_call.1} parent=47 // pred_check_branch
          %302 = sbr.rel (%p300) target = $region52
        $region51: #{tpu_custom_call.1} parent=47 // pred_region
          %303 = dma.done %s296, 6144
        $region52: #{tpu_custom_call.1} parent=47 // pred_fallthru
          _
        // Predicated region
        $region53: #{tpu_custom_call.1} parent=47 // pred_check
          %p304 = pneg %p68
        $region54: #{tpu_custom_call.1} parent=47 // pred_check_branch
          %306 = sbr.rel (%p304) target = $region56
        $region55: #{tpu_custom_call.1} parent=47 // pred_region
          %307 = dma.done [#allocation6], 24576
        $region56: #{tpu_custom_call.1} parent=47 // pred_fallthru
          _
        // Predicated region
        $region57: #{tpu_custom_call.1} parent=47 // pred_check
          %p308 = pneg %p110
        $region58: #{tpu_custom_call.1} parent=47 // pred_check_branch
          %310 = sbr.rel (%p308) target = $region60
        $region59: #{tpu_custom_call.1} parent=47 // pred_region
          %311 = dma.done [#allocation6], 1024
        $region60: #{tpu_custom_call.1} parent=47 // pred_fallthru
          _
        // Predicated region
        $region61: #{tpu_custom_call.1} parent=47 // pred_check
          %p312 = pneg %p152
        $region62: #{tpu_custom_call.1} parent=47 // pred_check_branch
          %314 = sbr.rel (%p312) target = $region64
        $region63: #{tpu_custom_call.1} parent=47 // pred_region
          %315 = dma.done [#allocation9], 1024
        $region64: #{tpu_custom_call.1} parent=47 // pred_fallthru
          _
        %s316 = sand.u32 %s34, 1
        %s317 = scalar_lea.sflag [#allocation3], %s316
        %s318 = sand.u32 %s34, 1
        %s319 = smul.addr %s318, 384
        %s320 = scalar_lea.vmem [#allocation2], %s319
        %p321 = pneg %p47
        %p322 = pneg %p44
        %p323 = pneg %p68
        %p324 = pneg %p65
        %p325 = pneg %p89
        %p326 = pneg %p86
        %p327 = pneg %p110
        %p328 = pneg %p107
        %p329 = pneg %p131
        %p330 = pneg %p128
        %p331 = pneg %p152
        %p332 = pneg %p149
        %p333 = pneg %p173
        %p334 = pneg %p170
        %p335 = pneg %p199
        %p336 = pneg %p196
        %s337 = sand.u32 %s186, 1
        %s338 = scalar_lea.sflag [#allocation4], %s337
        %s339 = sand.u32 %s186, 1
        %s340 = smul.addr %s339, 16
        %s341 = scalar_lea.vmem [#allocation10], %s340
        %s342 = smul.u32 2, %s26
        %s343 = smul.u32 2, %s26
        %v345 = vld [vmem:[%s299] sm:$0xff]
        %v346 = vld [vmem:[%s299 + $0x8] sm:$0xff]
        %v347 = vld [vmem:[%s299 + $0x10] sm:$0xff]
        %v348 = vld [vmem:[%s299 + $0x18] sm:$0xff]
        %v349 = vld [vmem:[%s299 + $0x20] sm:$0xff]
        %v350 = vld [vmem:[%s299 + $0x28] sm:$0xff]
        %v351 = vld [vmem:[%s299 + $0x30] sm:$0xff]
        %v352 = vld [vmem:[%s299 + $0x38] sm:$0xff]
        %v353 = vld [vmem:[%s299 + $0x40] sm:$0xff]
        %v354 = vld [vmem:[%s299 + $0x48] sm:$0xff]
        %v355 = vld [vmem:[%s299 + $0x50] sm:$0xff]
        %v356 = vld [vmem:[%s299 + $0x58] sm:$0xff]
        %v357 = vld [vmem:[%s299 + $0x60] sm:$0xff]
        %v358 = vld [vmem:[%s299 + $0x68] sm:$0xff]
        %v359 = vld [vmem:[%s299 + $0x70] sm:$0xff]
        %v360 = vld [vmem:[%s299 + $0x78] sm:$0xff]
        %v361 = vld [vmem:[%s299 + $0x80] sm:$0xff]
        %v362 = vld [vmem:[%s299 + $0x88] sm:$0xff]
        %v363 = vld [vmem:[%s299 + $0x90] sm:$0xff]
        %v364 = vld [vmem:[%s299 + $0x98] sm:$0xff]
        %v365 = vld [vmem:[%s299 + $0xa0] sm:$0xff]
        %v366 = vld [vmem:[%s299 + $0xa8] sm:$0xff]
        %v367 = vld [vmem:[%s299 + $0xb0] sm:$0xff]
        %v368 = vld [vmem:[%s299 + $0xb8] sm:$0xff]
        %v369 = vld [vmem:[%s299 + $0xc0] sm:$0xff]
        %v370 = vld [vmem:[%s299 + $0xc8] sm:$0xff]
        %v371 = vld [vmem:[%s299 + $0xd0] sm:$0xff]
        %v372 = vld [vmem:[%s299 + $0xd8] sm:$0xff]
        %v373 = vld [vmem:[%s299 + $0xe0] sm:$0xff]
        %v374 = vld [vmem:[%s299 + $0xe8] sm:$0xff]
        %v375 = vld [vmem:[%s299 + $0xf0] sm:$0xff]
        %v376 = vld [vmem:[%s299 + $0xf8] sm:$0xff]
        %v377 = vld [vmem:[%s299 + $0x100] sm:$0xff]
        %v378 = vld [vmem:[%s299 + $0x108] sm:$0xff]
        %v379 = vld [vmem:[%s299 + $0x110] sm:$0xff]
        %v380 = vld [vmem:[%s299 + $0x118] sm:$0xff]
        %v381 = vld [vmem:[%s299 + $0x120] sm:$0xff]
        %v382 = vld [vmem:[%s299 + $0x128] sm:$0xff]
        %v383 = vld [vmem:[%s299 + $0x130] sm:$0xff]
        %v384 = vld [vmem:[%s299 + $0x138] sm:$0xff]
        %v385 = vld [vmem:[%s299 + $0x140] sm:$0xff]
        %v386 = vld [vmem:[%s299 + $0x148] sm:$0xff]
        %v387 = vld [vmem:[%s299 + $0x150] sm:$0xff]
        %v388 = vld [vmem:[%s299 + $0x158] sm:$0xff]
        %v389 = vld [vmem:[%s299 + $0x160] sm:$0xff]
        %v390 = vld [vmem:[%s299 + $0x168] sm:$0xff]
        %v391 = vld [vmem:[%s299 + $0x170] sm:$0xff]
        %v392 = vld [vmem:[%s299 + $0x178] sm:$0xff]
        %v393 = vpack.c.bf16 %v369, %v345
        %v394 = vpack.c.bf16 %v370, %v346
        %v395 = vpack.c.bf16 %v371, %v347
        %v396 = vpack.c.bf16 %v372, %v348
        %v397 = vpack.c.bf16 %v373, %v349
        %v398 = vpack.c.bf16 %v374, %v350
        %v399 = vpack.c.bf16 %v375, %v351
        %v400 = vpack.c.bf16 %v376, %v352
        %v401 = vpack.c.bf16 %v377, %v353
        %v402 = vpack.c.bf16 %v378, %v354
        %v403 = vpack.c.bf16 %v379, %v355
        %v404 = vpack.c.bf16 %v380, %v356
        %v405 = vpack.c.bf16 %v381, %v357
        %v406 = vpack.c.bf16 %v382, %v358
        %v407 = vpack.c.bf16 %v383, %v359
        %v408 = vpack.c.bf16 %v384, %v360
        %v409 = vpack.c.bf16 %v385, %v361
        %v410 = vpack.c.bf16 %v386, %v362
        %v411 = vpack.c.bf16 %v387, %v363
        %v412 = vpack.c.bf16 %v388, %v364
        %v413 = vpack.c.bf16 %v389, %v365
        %v414 = vpack.c.bf16 %v390, %v366
        %v415 = vpack.c.bf16 %v391, %v367
        %v416 = vpack.c.bf16 %v392, %v368
        %v417 = vld [vmem:[#allocation5] sm:$0xf]
        %v418 = vld [vmem:[#allocation5 + $0x4] sm:$0xf]
        %v419 = vld [vmem:[#allocation5 + $0x8] sm:$0xf]
        %v420 = vld [vmem:[#allocation5 + $0xc] sm:$0xf]
        %v421 = vld [vmem:[#allocation5 + $0x10] sm:$0xf]
        %v422 = vld [vmem:[#allocation5 + $0x14] sm:$0xf]
        %v423 = vld [vmem:[#allocation5 + $0x18] sm:$0xf]
        %v424 = vld [vmem:[#allocation5 + $0x1c] sm:$0xf]
        %v425 = vld [vmem:[#allocation5 + $0x20] sm:$0xf]
        %v426 = vld [vmem:[#allocation5 + $0x24] sm:$0xf]
        %v427 = vld [vmem:[#allocation5 + $0x28] sm:$0xf]
        %v428 = vld [vmem:[#allocation5 + $0x2c] sm:$0xf]
        %v429 = vld [vmem:[#allocation5 + $0x30] sm:$0xf]
        %v430 = vld [vmem:[#allocation5 + $0x34] sm:$0xf]
        %v431 = vld [vmem:[#allocation5 + $0x38] sm:$0xf]
        %v432 = vld [vmem:[#allocation5 + $0x3c] sm:$0xf]
        %v433 = vld [vmem:[#allocation5 + $0x40] sm:$0xf]
        %v434 = vld [vmem:[#allocation5 + $0x44] sm:$0xf]
        %v435 = vld [vmem:[#allocation5 + $0x48] sm:$0xf]
        %v436 = vld [vmem:[#allocation5 + $0x4c] sm:$0xf]
        %v437 = vld [vmem:[#allocation5 + $0x50] sm:$0xf]
        %v438 = vld [vmem:[#allocation5 + $0x54] sm:$0xf]
        %v439 = vld [vmem:[#allocation5 + $0x58] sm:$0xf]
        %v440 = vld [vmem:[#allocation5 + $0x5c] sm:$0xf]
        %v441 = vld [vmem:[#allocation5 + $0x60] sm:$0xf]
        %v442 = vld [vmem:[#allocation5 + $0x64] sm:$0xf]
        %v443 = vld [vmem:[#allocation5 + $0x68] sm:$0xf]
        %v444 = vld [vmem:[#allocation5 + $0x6c] sm:$0xf]
        %v445 = vld [vmem:[#allocation5 + $0x70] sm:$0xf]
        %v446 = vld [vmem:[#allocation5 + $0x74] sm:$0xf]
        %v447 = vld [vmem:[#allocation5 + $0x78] sm:$0xf]
        %v448 = vld [vmem:[#allocation5 + $0x7c] sm:$0xf]
        %v449 = vld [vmem:[#allocation5 + $0x80] sm:$0xf]
        %v450 = vld [vmem:[#allocation5 + $0x84] sm:$0xf]
        %v451 = vld [vmem:[#allocation5 + $0x88] sm:$0xf]
        %v452 = vld [vmem:[#allocation5 + $0x8c] sm:$0xf]
        %v453 = vld [vmem:[#allocation5 + $0x90] sm:$0xf]
        %v454 = vld [vmem:[#allocation5 + $0x94] sm:$0xf]
        %v455 = vld [vmem:[#allocation5 + $0x98] sm:$0xf]
        %v456 = vld [vmem:[#allocation5 + $0x9c] sm:$0xf]
        %v457 = vld [vmem:[#allocation5 + $0xa0] sm:$0xf]
        %v458 = vld [vmem:[#allocation5 + $0xa4] sm:$0xf]
        %v459 = vld [vmem:[#allocation5 + $0xa8] sm:$0xf]
        %v460 = vld [vmem:[#allocation5 + $0xac] sm:$0xf]
        %v461 = vld [vmem:[#allocation5 + $0xb0] sm:$0xf]
        %v462 = vld [vmem:[#allocation5 + $0xb4] sm:$0xf]
        %v463 = vld [vmem:[#allocation5 + $0xb8] sm:$0xf]
        %v464 = vld [vmem:[#allocation5 + $0xbc] sm:$0xf]
        %v465 = vld [vmem:[#allocation5 + $0xc0] sm:$0xf]
        %v466 = vld [vmem:[#allocation5 + $0xc4] sm:$0xf]
        %v467 = vld [vmem:[#allocation5 + $0xc8] sm:$0xf]
        %v468 = vld [vmem:[#allocation5 + $0xcc] sm:$0xf]
        %v469 = vld [vmem:[#allocation5 + $0xd0] sm:$0xf]
        %v470 = vld [vmem:[#allocation5 + $0xd4] sm:$0xf]
        %v471 = vld [vmem:[#allocation5 + $0xd8] sm:$0xf]
        %v472 = vld [vmem:[#allocation5 + $0xdc] sm:$0xf]
        %v473 = vld [vmem:[#allocation5 + $0xe0] sm:$0xf]
        %v474 = vld [vmem:[#allocation5 + $0xe4] sm:$0xf]
        %v475 = vld [vmem:[#allocation5 + $0xe8] sm:$0xf]
        %v476 = vld [vmem:[#allocation5 + $0xec] sm:$0xf]
        %v477 = vld [vmem:[#allocation5 + $0xf0] sm:$0xf]
        %v478 = vld [vmem:[#allocation5 + $0xf4] sm:$0xf]
        %v479 = vld [vmem:[#allocation5 + $0xf8] sm:$0xf]
        %v480 = vld [vmem:[#allocation5 + $0xfc] sm:$0xf]
        %v481 = vld [vmem:[#allocation5 + $0x100] sm:$0xf]
        %v482 = vld [vmem:[#allocation5 + $0x104] sm:$0xf]
        %v483 = vld [vmem:[#allocation5 + $0x108] sm:$0xf]
        %v484 = vld [vmem:[#allocation5 + $0x10c] sm:$0xf]
        %v485 = vld [vmem:[#allocation5 + $0x110] sm:$0xf]
        %v486 = vld [vmem:[#allocation5 + $0x114] sm:$0xf]
        %v487 = vld [vmem:[#allocation5 + $0x118] sm:$0xf]
        %v488 = vld [vmem:[#allocation5 + $0x11c] sm:$0xf]
        %v489 = vld [vmem:[#allocation5 + $0x120] sm:$0xf]
        %v490 = vld [vmem:[#allocation5 + $0x124] sm:$0xf]
        %v491 = vld [vmem:[#allocation5 + $0x128] sm:$0xf]
        %v492 = vld [vmem:[#allocation5 + $0x12c] sm:$0xf]
        %v493 = vld [vmem:[#allocation5 + $0x130] sm:$0xf]
        %v494 = vld [vmem:[#allocation5 + $0x134] sm:$0xf]
        %v495 = vld [vmem:[#allocation5 + $0x138] sm:$0xf]
        %v496 = vld [vmem:[#allocation5 + $0x13c] sm:$0xf]
        %v497 = vld [vmem:[#allocation5 + $0x140] sm:$0xf]
        %v498 = vld [vmem:[#allocation5 + $0x144] sm:$0xf]
        %v499 = vld [vmem:[#allocation5 + $0x148] sm:$0xf]
        %v500 = vld [vmem:[#allocation5 + $0x14c] sm:$0xf]
        %v501 = vld [vmem:[#allocation5 + $0x150] sm:$0xf]
        %v502 = vld [vmem:[#allocation5 + $0x154] sm:$0xf]
        %v503 = vld [vmem:[#allocation5 + $0x158] sm:$0xf]
        %v504 = vld [vmem:[#allocation5 + $0x15c] sm:$0xf]
        %v505 = vld [vmem:[#allocation5 + $0x160] sm:$0xf]
        %v506 = vld [vmem:[#allocation5 + $0x164] sm:$0xf]
        %v507 = vld [vmem:[#allocation5 + $0x168] sm:$0xf]
        %v508 = vld [vmem:[#allocation5 + $0x16c] sm:$0xf]
        %v509 = vld [vmem:[#allocation5 + $0x170] sm:$0xf]
        %v510 = vld [vmem:[#allocation5 + $0x174] sm:$0xf]
        %v511 = vld [vmem:[#allocation5 + $0x178] sm:$0xf]
        %v512 = vld [vmem:[#allocation5 + $0x17c] sm:$0xf]
        %v513 = vld [vmem:[#allocation5 + $0x180] sm:$0xf]
        %v514 = vld [vmem:[#allocation5 + $0x184] sm:$0xf]
        %v515 = vld [vmem:[#allocation5 + $0x188] sm:$0xf]
        %v516 = vld [vmem:[#allocation5 + $0x18c] sm:$0xf]
        %v517 = vld [vmem:[#allocation5 + $0x190] sm:$0xf]
        %v518 = vld [vmem:[#allocation5 + $0x194] sm:$0xf]
        %v519 = vld [vmem:[#allocation5 + $0x198] sm:$0xf]
        %v520 = vld [vmem:[#allocation5 + $0x19c] sm:$0xf]
        %v521 = vld [vmem:[#allocation5 + $0x1a0] sm:$0xf]
        %v522 = vld [vmem:[#allocation5 + $0x1a4] sm:$0xf]
        %v523 = vld [vmem:[#allocation5 + $0x1a8] sm:$0xf]
        %v524 = vld [vmem:[#allocation5 + $0x1ac] sm:$0xf]
        %v525 = vld [vmem:[#allocation5 + $0x1b0] sm:$0xf]
        %v526 = vld [vmem:[#allocation5 + $0x1b4] sm:$0xf]
        %v527 = vld [vmem:[#allocation5 + $0x1b8] sm:$0xf]
        %v528 = vld [vmem:[#allocation5 + $0x1bc] sm:$0xf]
        %v529 = vld [vmem:[#allocation5 + $0x1c0] sm:$0xf]
        %v530 = vld [vmem:[#allocation5 + $0x1c4] sm:$0xf]
        %v531 = vld [vmem:[#allocation5 + $0x1c8] sm:$0xf]
        %v532 = vld [vmem:[#allocation5 + $0x1cc] sm:$0xf]
        %v533 = vld [vmem:[#allocation5 + $0x1d0] sm:$0xf]
        %v534 = vld [vmem:[#allocation5 + $0x1d4] sm:$0xf]
        %v535 = vld [vmem:[#allocation5 + $0x1d8] sm:$0xf]
        %v536 = vld [vmem:[#allocation5 + $0x1dc] sm:$0xf]
        %v537 = vld [vmem:[#allocation5 + $0x1e0] sm:$0xf]
        %v538 = vld [vmem:[#allocation5 + $0x1e4] sm:$0xf]
        %v539 = vld [vmem:[#allocation5 + $0x1e8] sm:$0xf]
        %v540 = vld [vmem:[#allocation5 + $0x1ec] sm:$0xf]
        %v541 = vld [vmem:[#allocation5 + $0x1f0] sm:$0xf]
        %v542 = vld [vmem:[#allocation5 + $0x1f4] sm:$0xf]
        %v543 = vld [vmem:[#allocation5 + $0x1f8] sm:$0xf]
        %v544 = vld [vmem:[#allocation5 + $0x1fc] sm:$0xf]
        %v545 = vld [vmem:[#allocation5 + $0x200] sm:$0xf]
        %v546 = vld [vmem:[#allocation5 + $0x204] sm:$0xf]
        %v547 = vld [vmem:[#allocation5 + $0x208] sm:$0xf]
        %v548 = vld [vmem:[#allocation5 + $0x20c] sm:$0xf]
        %v549 = vld [vmem:[#allocation5 + $0x210] sm:$0xf]
        %v550 = vld [vmem:[#allocation5 + $0x214] sm:$0xf]
        %v551 = vld [vmem:[#allocation5 + $0x218] sm:$0xf]
        %v552 = vld [vmem:[#allocation5 + $0x21c] sm:$0xf]
        %v553 = vld [vmem:[#allocation5 + $0x220] sm:$0xf]
        %v554 = vld [vmem:[#allocation5 + $0x224] sm:$0xf]
        %v555 = vld [vmem:[#allocation5 + $0x228] sm:$0xf]
        %v556 = vld [vmem:[#allocation5 + $0x22c] sm:$0xf]
        %v557 = vld [vmem:[#allocation5 + $0x230] sm:$0xf]
        %v558 = vld [vmem:[#allocation5 + $0x234] sm:$0xf]
        %v559 = vld [vmem:[#allocation5 + $0x238] sm:$0xf]
        %v560 = vld [vmem:[#allocation5 + $0x23c] sm:$0xf]
        %v561 = vld [vmem:[#allocation5 + $0x240] sm:$0xf]
        %v562 = vld [vmem:[#allocation5 + $0x244] sm:$0xf]
        %v563 = vld [vmem:[#allocation5 + $0x248] sm:$0xf]
        %v564 = vld [vmem:[#allocation5 + $0x24c] sm:$0xf]
        %v565 = vld [vmem:[#allocation5 + $0x250] sm:$0xf]
        %v566 = vld [vmem:[#allocation5 + $0x254] sm:$0xf]
        %v567 = vld [vmem:[#allocation5 + $0x258] sm:$0xf]
        %v568 = vld [vmem:[#allocation5 + $0x25c] sm:$0xf]
        %v569 = vld [vmem:[#allocation5 + $0x260] sm:$0xf]
        %v570 = vld [vmem:[#allocation5 + $0x264] sm:$0xf]
        %v571 = vld [vmem:[#allocation5 + $0x268] sm:$0xf]
        %v572 = vld [vmem:[#allocation5 + $0x26c] sm:$0xf]
        %v573 = vld [vmem:[#allocation5 + $0x270] sm:$0xf]
        %v574 = vld [vmem:[#allocation5 + $0x274] sm:$0xf]
        %v575 = vld [vmem:[#allocation5 + $0x278] sm:$0xf]
        %v576 = vld [vmem:[#allocation5 + $0x27c] sm:$0xf]
        %v577 = vld [vmem:[#allocation5 + $0x280] sm:$0xf]
        %v578 = vld [vmem:[#allocation5 + $0x284] sm:$0xf]
        %v579 = vld [vmem:[#allocation5 + $0x288] sm:$0xf]
        %v580 = vld [vmem:[#allocation5 + $0x28c] sm:$0xf]
        %v581 = vld [vmem:[#allocation5 + $0x290] sm:$0xf]
        %v582 = vld [vmem:[#allocation5 + $0x294] sm:$0xf]
        %v583 = vld [vmem:[#allocation5 + $0x298] sm:$0xf]
        %v584 = vld [vmem:[#allocation5 + $0x29c] sm:$0xf]
        %v585 = vld [vmem:[#allocation5 + $0x2a0] sm:$0xf]
        %v586 = vld [vmem:[#allocation5 + $0x2a4] sm:$0xf]
        %v587 = vld [vmem:[#allocation5 + $0x2a8] sm:$0xf]
        %v588 = vld [vmem:[#allocation5 + $0x2ac] sm:$0xf]
        %v589 = vld [vmem:[#allocation5 + $0x2b0] sm:$0xf]
        %v590 = vld [vmem:[#allocation5 + $0x2b4] sm:$0xf]
        %v591 = vld [vmem:[#allocation5 + $0x2b8] sm:$0xf]
        %v592 = vld [vmem:[#allocation5 + $0x2bc] sm:$0xf]
        %v593 = vld [vmem:[#allocation5 + $0x2c0] sm:$0xf]
        %v594 = vld [vmem:[#allocation5 + $0x2c4] sm:$0xf]
        %v595 = vld [vmem:[#allocation5 + $0x2c8] sm:$0xf]
        %v596 = vld [vmem:[#allocation5 + $0x2cc] sm:$0xf]
        %v597 = vld [vmem:[#allocation5 + $0x2d0] sm:$0xf]
        %v598 = vld [vmem:[#allocation5 + $0x2d4] sm:$0xf]
        %v599 = vld [vmem:[#allocation5 + $0x2d8] sm:$0xf]
        %v600 = vld [vmem:[#allocation5 + $0x2dc] sm:$0xf]
        %v601 = vld [vmem:[#allocation5 + $0x2e0] sm:$0xf]
        %v602 = vld [vmem:[#allocation5 + $0x2e4] sm:$0xf]
        %v603 = vld [vmem:[#allocation5 + $0x2e8] sm:$0xf]
        %v604 = vld [vmem:[#allocation5 + $0x2ec] sm:$0xf]
        %v605 = vld [vmem:[#allocation5 + $0x2f0] sm:$0xf]
        %v606 = vld [vmem:[#allocation5 + $0x2f4] sm:$0xf]
        %v607 = vld [vmem:[#allocation5 + $0x2f8] sm:$0xf]
        %v608 = vld [vmem:[#allocation5 + $0x2fc] sm:$0xf]
        %v609 = vld [vmem:[#allocation5 + $0x300] sm:$0xf]
        %v610 = vld [vmem:[#allocation5 + $0x304] sm:$0xf]
        %v611 = vld [vmem:[#allocation5 + $0x308] sm:$0xf]
        %v612 = vld [vmem:[#allocation5 + $0x30c] sm:$0xf]
        %v613 = vld [vmem:[#allocation5 + $0x310] sm:$0xf]
        %v614 = vld [vmem:[#allocation5 + $0x314] sm:$0xf]
        %v615 = vld [vmem:[#allocation5 + $0x318] sm:$0xf]
        %v616 = vld [vmem:[#allocation5 + $0x31c] sm:$0xf]
        %v617 = vld [vmem:[#allocation5 + $0x320] sm:$0xf]
        %v618 = vld [vmem:[#allocation5 + $0x324] sm:$0xf]
        %v619 = vld [vmem:[#allocation5 + $0x328] sm:$0xf]
        %v620 = vld [vmem:[#allocation5 + $0x32c] sm:$0xf]
        %v621 = vld [vmem:[#allocation5 + $0x330] sm:$0xf]
        %v622 = vld [vmem:[#allocation5 + $0x334] sm:$0xf]
        %v623 = vld [vmem:[#allocation5 + $0x338] sm:$0xf]
        %v624 = vld [vmem:[#allocation5 + $0x33c] sm:$0xf]
        %v625 = vld [vmem:[#allocation5 + $0x340] sm:$0xf]
        %v626 = vld [vmem:[#allocation5 + $0x344] sm:$0xf]
        %v627 = vld [vmem:[#allocation5 + $0x348] sm:$0xf]
        %v628 = vld [vmem:[#allocation5 + $0x34c] sm:$0xf]
        %v629 = vld [vmem:[#allocation5 + $0x350] sm:$0xf]
        %v630 = vld [vmem:[#allocation5 + $0x354] sm:$0xf]
        %v631 = vld [vmem:[#allocation5 + $0x358] sm:$0xf]
        %v632 = vld [vmem:[#allocation5 + $0x35c] sm:$0xf]
        %v633 = vld [vmem:[#allocation5 + $0x360] sm:$0xf]
        %v634 = vld [vmem:[#allocation5 + $0x364] sm:$0xf]
        %v635 = vld [vmem:[#allocation5 + $0x368] sm:$0xf]
        %v636 = vld [vmem:[#allocation5 + $0x36c] sm:$0xf]
        %v637 = vld [vmem:[#allocation5 + $0x370] sm:$0xf]
        %v638 = vld [vmem:[#allocation5 + $0x374] sm:$0xf]
        %v639 = vld [vmem:[#allocation5 + $0x378] sm:$0xf]
        %v640 = vld [vmem:[#allocation5 + $0x37c] sm:$0xf]
        %v641 = vld [vmem:[#allocation5 + $0x380] sm:$0xf]
        %v642 = vld [vmem:[#allocation5 + $0x384] sm:$0xf]
        %v643 = vld [vmem:[#allocation5 + $0x388] sm:$0xf]
        %v644 = vld [vmem:[#allocation5 + $0x38c] sm:$0xf]
        %v645 = vld [vmem:[#allocation5 + $0x390] sm:$0xf]
        %v646 = vld [vmem:[#allocation5 + $0x394] sm:$0xf]
        %v647 = vld [vmem:[#allocation5 + $0x398] sm:$0xf]
        %v648 = vld [vmem:[#allocation5 + $0x39c] sm:$0xf]
        %v649 = vld [vmem:[#allocation5 + $0x3a0] sm:$0xf]
        %v650 = vld [vmem:[#allocation5 + $0x3a4] sm:$0xf]
        %v651 = vld [vmem:[#allocation5 + $0x3a8] sm:$0xf]
        %v652 = vld [vmem:[#allocation5 + $0x3ac] sm:$0xf]
        %v653 = vld [vmem:[#allocation5 + $0x3b0] sm:$0xf]
        %v654 = vld [vmem:[#allocation5 + $0x3b4] sm:$0xf]
        %v655 = vld [vmem:[#allocation5 + $0x3b8] sm:$0xf]
        %v656 = vld [vmem:[#allocation5 + $0x3bc] sm:$0xf]
        %v657 = vld [vmem:[#allocation5 + $0x3c0] sm:$0xf]
        %v658 = vld [vmem:[#allocation5 + $0x3c4] sm:$0xf]
        %v659 = vld [vmem:[#allocation5 + $0x3c8] sm:$0xf]
        %v660 = vld [vmem:[#allocation5 + $0x3cc] sm:$0xf]
        %v661 = vld [vmem:[#allocation5 + $0x3d0] sm:$0xf]
        %v662 = vld [vmem:[#allocation5 + $0x3d4] sm:$0xf]
        %v663 = vld [vmem:[#allocation5 + $0x3d8] sm:$0xf]
        %v664 = vld [vmem:[#allocation5 + $0x3dc] sm:$0xf]
        %v665 = vld [vmem:[#allocation5 + $0x3e0] sm:$0xf]
        %v666 = vld [vmem:[#allocation5 + $0x3e4] sm:$0xf]
        %v667 = vld [vmem:[#allocation5 + $0x3e8] sm:$0xf]
        %v668 = vld [vmem:[#allocation5 + $0x3ec] sm:$0xf]
        %v669 = vld [vmem:[#allocation5 + $0x3f0] sm:$0xf]
        %v670 = vld [vmem:[#allocation5 + $0x3f4] sm:$0xf]
        %v671 = vld [vmem:[#allocation5 + $0x3f8] sm:$0xf]
        %v672 = vld [vmem:[#allocation5 + $0x3fc] sm:$0xf]
        %v673 = vld [vmem:[#allocation5 + $0x400] sm:$0xf]
        %v674 = vld [vmem:[#allocation5 + $0x404] sm:$0xf]
        %v675 = vld [vmem:[#allocation5 + $0x408] sm:$0xf]
        %v676 = vld [vmem:[#allocation5 + $0x40c] sm:$0xf]
        %v677 = vld [vmem:[#allocation5 + $0x410] sm:$0xf]
        %v678 = vld [vmem:[#allocation5 + $0x414] sm:$0xf]
        %v679 = vld [vmem:[#allocation5 + $0x418] sm:$0xf]
        %v680 = vld [vmem:[#allocation5 + $0x41c] sm:$0xf]
        %v681 = vld [vmem:[#allocation5 + $0x420] sm:$0xf]
        %v682 = vld [vmem:[#allocation5 + $0x424] sm:$0xf]
        %v683 = vld [vmem:[#allocation5 + $0x428] sm:$0xf]
        %v684 = vld [vmem:[#allocation5 + $0x42c] sm:$0xf]
        %v685 = vld [vmem:[#allocation5 + $0x430] sm:$0xf]
        %v686 = vld [vmem:[#allocation5 + $0x434] sm:$0xf]
        %v687 = vld [vmem:[#allocation5 + $0x438] sm:$0xf]
        %v688 = vld [vmem:[#allocation5 + $0x43c] sm:$0xf]
        %v689 = vld [vmem:[#allocation5 + $0x440] sm:$0xf]
        %v690 = vld [vmem:[#allocation5 + $0x444] sm:$0xf]
        %v691 = vld [vmem:[#allocation5 + $0x448] sm:$0xf]
        %v692 = vld [vmem:[#allocation5 + $0x44c] sm:$0xf]
        %v693 = vld [vmem:[#allocation5 + $0x450] sm:$0xf]
        %v694 = vld [vmem:[#allocation5 + $0x454] sm:$0xf]
        %v695 = vld [vmem:[#allocation5 + $0x458] sm:$0xf]
        %v696 = vld [vmem:[#allocation5 + $0x45c] sm:$0xf]
        %v697 = vld [vmem:[#allocation5 + $0x460] sm:$0xf]
        %v698 = vld [vmem:[#allocation5 + $0x464] sm:$0xf]
        %v699 = vld [vmem:[#allocation5 + $0x468] sm:$0xf]
        %v700 = vld [vmem:[#allocation5 + $0x46c] sm:$0xf]
        %v701 = vld [vmem:[#allocation5 + $0x470] sm:$0xf]
        %v702 = vld [vmem:[#allocation5 + $0x474] sm:$0xf]
        %v703 = vld [vmem:[#allocation5 + $0x478] sm:$0xf]
        %v704 = vld [vmem:[#allocation5 + $0x47c] sm:$0xf]
        %v705 = vld [vmem:[#allocation5 + $0x480] sm:$0xf]
        %v706 = vld [vmem:[#allocation5 + $0x484] sm:$0xf]
        %v707 = vld [vmem:[#allocation5 + $0x488] sm:$0xf]
        %v708 = vld [vmem:[#allocation5 + $0x48c] sm:$0xf]
        %v709 = vld [vmem:[#allocation5 + $0x490] sm:$0xf]
        %v710 = vld [vmem:[#allocation5 + $0x494] sm:$0xf]
        %v711 = vld [vmem:[#allocation5 + $0x498] sm:$0xf]
        %v712 = vld [vmem:[#allocation5 + $0x49c] sm:$0xf]
        %v713 = vld [vmem:[#allocation5 + $0x4a0] sm:$0xf]
        %v714 = vld [vmem:[#allocation5 + $0x4a4] sm:$0xf]
        %v715 = vld [vmem:[#allocation5 + $0x4a8] sm:$0xf]
        %v716 = vld [vmem:[#allocation5 + $0x4ac] sm:$0xf]
        %v717 = vld [vmem:[#allocation5 + $0x4b0] sm:$0xf]
        %v718 = vld [vmem:[#allocation5 + $0x4b4] sm:$0xf]
        %v719 = vld [vmem:[#allocation5 + $0x4b8] sm:$0xf]
        %v720 = vld [vmem:[#allocation5 + $0x4bc] sm:$0xf]
        %v721 = vld [vmem:[#allocation5 + $0x4c0] sm:$0xf]
        %v722 = vld [vmem:[#allocation5 + $0x4c4] sm:$0xf]
        %v723 = vld [vmem:[#allocation5 + $0x4c8] sm:$0xf]
        %v724 = vld [vmem:[#allocation5 + $0x4cc] sm:$0xf]
        %v725 = vld [vmem:[#allocation5 + $0x4d0] sm:$0xf]
        %v726 = vld [vmem:[#allocation5 + $0x4d4] sm:$0xf]
        %v727 = vld [vmem:[#allocation5 + $0x4d8] sm:$0xf]
        %v728 = vld [vmem:[#allocation5 + $0x4dc] sm:$0xf]
        %v729 = vld [vmem:[#allocation5 + $0x4e0] sm:$0xf]
        %v730 = vld [vmem:[#allocation5 + $0x4e4] sm:$0xf]
        %v731 = vld [vmem:[#allocation5 + $0x4e8] sm:$0xf]
        %v732 = vld [vmem:[#allocation5 + $0x4ec] sm:$0xf]
        %v733 = vld [vmem:[#allocation5 + $0x4f0] sm:$0xf]
        %v734 = vld [vmem:[#allocation5 + $0x4f4] sm:$0xf]
        %v735 = vld [vmem:[#allocation5 + $0x4f8] sm:$0xf]
        %v736 = vld [vmem:[#allocation5 + $0x4fc] sm:$0xf]
        %v737 = vld [vmem:[#allocation5 + $0x500] sm:$0xf]
        %v738 = vld [vmem:[#allocation5 + $0x504] sm:$0xf]
        %v739 = vld [vmem:[#allocation5 + $0x508] sm:$0xf]
        %v740 = vld [vmem:[#allocation5 + $0x50c] sm:$0xf]
        %v741 = vld [vmem:[#allocation5 + $0x510] sm:$0xf]
        %v742 = vld [vmem:[#allocation5 + $0x514] sm:$0xf]
        %v743 = vld [vmem:[#allocation5 + $0x518] sm:$0xf]
        %v744 = vld [vmem:[#allocation5 + $0x51c] sm:$0xf]
        %v745 = vld [vmem:[#allocation5 + $0x520] sm:$0xf]
        %v746 = vld [vmem:[#allocation5 + $0x524] sm:$0xf]
        %v747 = vld [vmem:[#allocation5 + $0x528] sm:$0xf]
        %v748 = vld [vmem:[#allocation5 + $0x52c] sm:$0xf]
        %v749 = vld [vmem:[#allocation5 + $0x530] sm:$0xf]
        %v750 = vld [vmem:[#allocation5 + $0x534] sm:$0xf]
        %v751 = vld [vmem:[#allocation5 + $0x538] sm:$0xf]
        %v752 = vld [vmem:[#allocation5 + $0x53c] sm:$0xf]
        %v753 = vld [vmem:[#allocation5 + $0x540] sm:$0xf]
        %v754 = vld [vmem:[#allocation5 + $0x544] sm:$0xf]
        %v755 = vld [vmem:[#allocation5 + $0x548] sm:$0xf]
        %v756 = vld [vmem:[#allocation5 + $0x54c] sm:$0xf]
        %v757 = vld [vmem:[#allocation5 + $0x550] sm:$0xf]
        %v758 = vld [vmem:[#allocation5 + $0x554] sm:$0xf]
        %v759 = vld [vmem:[#allocation5 + $0x558] sm:$0xf]
        %v760 = vld [vmem:[#allocation5 + $0x55c] sm:$0xf]
        %v761 = vld [vmem:[#allocation5 + $0x560] sm:$0xf]
        %v762 = vld [vmem:[#allocation5 + $0x564] sm:$0xf]
        %v763 = vld [vmem:[#allocation5 + $0x568] sm:$0xf]
        %v764 = vld [vmem:[#allocation5 + $0x56c] sm:$0xf]
        %v765 = vld [vmem:[#allocation5 + $0x570] sm:$0xf]
        %v766 = vld [vmem:[#allocation5 + $0x574] sm:$0xf]
        %v767 = vld [vmem:[#allocation5 + $0x578] sm:$0xf]
        %v768 = vld [vmem:[#allocation5 + $0x57c] sm:$0xf]
        %v769 = vld [vmem:[#allocation5 + $0x580] sm:$0xf]
        %v770 = vld [vmem:[#allocation5 + $0x584] sm:$0xf]
        %v771 = vld [vmem:[#allocation5 + $0x588] sm:$0xf]
        %v772 = vld [vmem:[#allocation5 + $0x58c] sm:$0xf]
        %v773 = vld [vmem:[#allocation5 + $0x590] sm:$0xf]
        %v774 = vld [vmem:[#allocation5 + $0x594] sm:$0xf]
        %v775 = vld [vmem:[#allocation5 + $0x598] sm:$0xf]
        %v776 = vld [vmem:[#allocation5 + $0x59c] sm:$0xf]
        %v777 = vld [vmem:[#allocation5 + $0x5a0] sm:$0xf]
        %v778 = vld [vmem:[#allocation5 + $0x5a4] sm:$0xf]
        %v779 = vld [vmem:[#allocation5 + $0x5a8] sm:$0xf]
        %v780 = vld [vmem:[#allocation5 + $0x5ac] sm:$0xf]
        %v781 = vld [vmem:[#allocation5 + $0x5b0] sm:$0xf]
        %v782 = vld [vmem:[#allocation5 + $0x5b4] sm:$0xf]
        %v783 = vld [vmem:[#allocation5 + $0x5b8] sm:$0xf]
        %v784 = vld [vmem:[#allocation5 + $0x5bc] sm:$0xf]
        %v785 = vld [vmem:[#allocation5 + $0x5c0] sm:$0xf]
        %v786 = vld [vmem:[#allocation5 + $0x5c4] sm:$0xf]
        %v787 = vld [vmem:[#allocation5 + $0x5c8] sm:$0xf]
        %v788 = vld [vmem:[#allocation5 + $0x5cc] sm:$0xf]
        %v789 = vld [vmem:[#allocation5 + $0x5d0] sm:$0xf]
        %v790 = vld [vmem:[#allocation5 + $0x5d4] sm:$0xf]
        %v791 = vld [vmem:[#allocation5 + $0x5d8] sm:$0xf]
        %v792 = vld [vmem:[#allocation5 + $0x5dc] sm:$0xf]
        %v793 = vld [vmem:[#allocation5 + $0x5e0] sm:$0xf]
        %v794 = vld [vmem:[#allocation5 + $0x5e4] sm:$0xf]
        %v795 = vld [vmem:[#allocation5 + $0x5e8] sm:$0xf]
        %v796 = vld [vmem:[#allocation5 + $0x5ec] sm:$0xf]
        %v797 = vld [vmem:[#allocation5 + $0x5f0] sm:$0xf]
        %v798 = vld [vmem:[#allocation5 + $0x5f4] sm:$0xf]
        %v799 = vld [vmem:[#allocation5 + $0x5f8] sm:$0xf]
        %v800 = vld [vmem:[#allocation5 + $0x5fc] sm:$0xf]
        %v801 = vld [vmem:[%s2] sm:$0x1]
        %v803 = vlaneseq
        %v804 = vshrl.u32 %v803, 7
        %v805 = vsub.s32 0, %v804
        %v806 = vrot.slane %v801, %v805
        %v1192 = vunpack.c.l.b16 %v417
        %v1193 = vunpack.c.l.b16 %v418
        %v1194 = vunpack.c.l.b16 %v419
        %v1195 = vunpack.c.l.b16 %v420
        %v1196 = vunpack.c.l.b16 %v421
        %v1197 = vunpack.c.l.b16 %v422
        %v1198 = vunpack.c.l.b16 %v423
        %v1199 = vunpack.c.l.b16 %v424
        %v1200 = vunpack.c.l.b16 %v425
        %v1201 = vunpack.c.l.b16 %v426
        %v1202 = vunpack.c.l.b16 %v427
        %v1203 = vunpack.c.l.b16 %v428
        %v1204 = vunpack.c.l.b16 %v429
        %v1205 = vunpack.c.l.b16 %v430
        %v1206 = vunpack.c.l.b16 %v431
        %v1207 = vunpack.c.l.b16 %v432
        %v1208 = vunpack.c.l.b16 %v433
        %v1209 = vunpack.c.l.b16 %v434
        %v1210 = vunpack.c.l.b16 %v435
        %v1211 = vunpack.c.l.b16 %v436
        %v1212 = vunpack.c.l.b16 %v437
        %v1213 = vunpack.c.l.b16 %v438
        %v1214 = vunpack.c.l.b16 %v439
        %v1215 = vunpack.c.l.b16 %v440
        %v1216 = vunpack.c.l.b16 %v441
        %v1217 = vunpack.c.l.b16 %v442
        %v1218 = vunpack.c.l.b16 %v443
        %v1219 = vunpack.c.l.b16 %v444
        %v1220 = vunpack.c.l.b16 %v445
        %v1221 = vunpack.c.l.b16 %v446
        %v1222 = vunpack.c.l.b16 %v447
        %v1223 = vunpack.c.l.b16 %v448
        %v1224 = vunpack.c.l.b16 %v449
        %v1225 = vunpack.c.l.b16 %v450
        %v1226 = vunpack.c.l.b16 %v451
        %v1227 = vunpack.c.l.b16 %v452
        %v1228 = vunpack.c.l.b16 %v453
        %v1229 = vunpack.c.l.b16 %v454
        %v1230 = vunpack.c.l.b16 %v455
        %v1231 = vunpack.c.l.b16 %v456
        %v1232 = vunpack.c.l.b16 %v457
        %v1233 = vunpack.c.l.b16 %v458
        %v1234 = vunpack.c.l.b16 %v459
        %v1235 = vunpack.c.l.b16 %v460
        %v1236 = vunpack.c.l.b16 %v461
        %v1237 = vunpack.c.l.b16 %v462
        %v1238 = vunpack.c.l.b16 %v463
        %v1239 = vunpack.c.l.b16 %v464
        %v1240 = vunpack.c.l.b16 %v465
        %v1241 = vunpack.c.l.b16 %v466
        %v1242 = vunpack.c.l.b16 %v467
        %v1243 = vunpack.c.l.b16 %v468
        %v1244 = vunpack.c.l.b16 %v469
        %v1245 = vunpack.c.l.b16 %v470
        %v1246 = vunpack.c.l.b16 %v471
        %v1247 = vunpack.c.l.b16 %v472
        %v1248 = vunpack.c.l.b16 %v473
        %v1249 = vunpack.c.l.b16 %v474
        %v1250 = vunpack.c.l.b16 %v475
        %v1251 = vunpack.c.l.b16 %v476
        %v1252 = vunpack.c.l.b16 %v477
        %v1253 = vunpack.c.l.b16 %v478
        %v1254 = vunpack.c.l.b16 %v479
        %v1255 = vunpack.c.l.b16 %v480
        %v1256 = vunpack.c.l.b16 %v481
        %v1257 = vunpack.c.l.b16 %v482
        %v1258 = vunpack.c.l.b16 %v483
        %v1259 = vunpack.c.l.b16 %v484
        %v1260 = vunpack.c.l.b16 %v485
        %v1261 = vunpack.c.l.b16 %v486
        %v1262 = vunpack.c.l.b16 %v487
        %v1263 = vunpack.c.l.b16 %v488
        %v1264 = vunpack.c.l.b16 %v489
        %v1265 = vunpack.c.l.b16 %v490
        %v1266 = vunpack.c.l.b16 %v491
        %v1267 = vunpack.c.l.b16 %v492
        %v1268 = vunpack.c.l.b16 %v493
        %v1269 = vunpack.c.l.b16 %v494
        %v1270 = vunpack.c.l.b16 %v495
        %v1271 = vunpack.c.l.b16 %v496
        %v1272 = vunpack.c.l.b16 %v497
        %v1273 = vunpack.c.l.b16 %v498
        %v1274 = vunpack.c.l.b16 %v499
        %v1275 = vunpack.c.l.b16 %v500
        %v1276 = vunpack.c.l.b16 %v501
        %v1277 = vunpack.c.l.b16 %v502
        %v1278 = vunpack.c.l.b16 %v503
        %v1279 = vunpack.c.l.b16 %v504
        %v1280 = vunpack.c.l.b16 %v505
        %v1281 = vunpack.c.l.b16 %v506
        %v1282 = vunpack.c.l.b16 %v507
        %v1283 = vunpack.c.l.b16 %v508
        %v1284 = vunpack.c.l.b16 %v509
        %v1285 = vunpack.c.l.b16 %v510
        %v1286 = vunpack.c.l.b16 %v511
        %v1287 = vunpack.c.l.b16 %v512
        %v1288 = vunpack.c.l.b16 %v513
        %v1289 = vunpack.c.l.b16 %v514
        %v1290 = vunpack.c.l.b16 %v515
        %v1291 = vunpack.c.l.b16 %v516
        %v1292 = vunpack.c.l.b16 %v517
        %v1293 = vunpack.c.l.b16 %v518
        %v1294 = vunpack.c.l.b16 %v519
        %v1295 = vunpack.c.l.b16 %v520
        %v1296 = vunpack.c.l.b16 %v521
        %v1297 = vunpack.c.l.b16 %v522
        %v1298 = vunpack.c.l.b16 %v523
        %v1299 = vunpack.c.l.b16 %v524
        %v1300 = vunpack.c.l.b16 %v525
        %v1301 = vunpack.c.l.b16 %v526
        %v1302 = vunpack.c.l.b16 %v527
        %v1303 = vunpack.c.l.b16 %v528
        %v1304 = vunpack.c.l.b16 %v529
        %v1305 = vunpack.c.l.b16 %v530
        %v1306 = vunpack.c.l.b16 %v531
        %v1307 = vunpack.c.l.b16 %v532
        %v1308 = vunpack.c.l.b16 %v533
        %v1309 = vunpack.c.l.b16 %v534
        %v1310 = vunpack.c.l.b16 %v535
        %v1311 = vunpack.c.l.b16 %v536
        %v1312 = vunpack.c.l.b16 %v537
        %v1313 = vunpack.c.l.b16 %v538
        %v1314 = vunpack.c.l.b16 %v539
        %v1315 = vunpack.c.l.b16 %v540
        %v1316 = vunpack.c.l.b16 %v541
        %v1317 = vunpack.c.l.b16 %v542
        %v1318 = vunpack.c.l.b16 %v543
        %v1319 = vunpack.c.l.b16 %v544
        %v1320 = vunpack.c.l.b16 %v545
        %v1321 = vunpack.c.l.b16 %v546
        %v1322 = vunpack.c.l.b16 %v547
        %v1323 = vunpack.c.l.b16 %v548
        %v1324 = vunpack.c.l.b16 %v549
        %v1325 = vunpack.c.l.b16 %v550
        %v1326 = vunpack.c.l.b16 %v551
        %v1327 = vunpack.c.l.b16 %v552
        %v1328 = vunpack.c.l.b16 %v553
        %v1329 = vunpack.c.l.b16 %v554
        %v1330 = vunpack.c.l.b16 %v555
        %v1331 = vunpack.c.l.b16 %v556
        %v1332 = vunpack.c.l.b16 %v557
        %v1333 = vunpack.c.l.b16 %v558
        %v1334 = vunpack.c.l.b16 %v559
        %v1335 = vunpack.c.l.b16 %v560
        %v1336 = vunpack.c.l.b16 %v561
        %v1337 = vunpack.c.l.b16 %v562
        %v1338 = vunpack.c.l.b16 %v563
        %v1339 = vunpack.c.l.b16 %v564
        %v1340 = vunpack.c.l.b16 %v565
        %v1341 = vunpack.c.l.b16 %v566
        %v1342 = vunpack.c.l.b16 %v567
        %v1343 = vunpack.c.l.b16 %v568
        %v1344 = vunpack.c.l.b16 %v569
        %v1345 = vunpack.c.l.b16 %v570
        %v1346 = vunpack.c.l.b16 %v571
        %v1347 = vunpack.c.l.b16 %v572
        %v1348 = vunpack.c.l.b16 %v573
        %v1349 = vunpack.c.l.b16 %v574
        %v1350 = vunpack.c.l.b16 %v575
        %v1351 = vunpack.c.l.b16 %v576
        %v1352 = vunpack.c.l.b16 %v577
        %v1353 = vunpack.c.l.b16 %v578
        %v1354 = vunpack.c.l.b16 %v579
        %v1355 = vunpack.c.l.b16 %v580
        %v1356 = vunpack.c.l.b16 %v581
        %v1357 = vunpack.c.l.b16 %v582
        %v1358 = vunpack.c.l.b16 %v583
        %v1359 = vunpack.c.l.b16 %v584
        %v1360 = vunpack.c.l.b16 %v585
        %v1361 = vunpack.c.l.b16 %v586
        %v1362 = vunpack.c.l.b16 %v587
        %v1363 = vunpack.c.l.b16 %v588
        %v1364 = vunpack.c.l.b16 %v589
        %v1365 = vunpack.c.l.b16 %v590
        %v1366 = vunpack.c.l.b16 %v591
        %v1367 = vunpack.c.l.b16 %v592
        %v1368 = vunpack.c.l.b16 %v593
        %v1369 = vunpack.c.l.b16 %v594
        %v1370 = vunpack.c.l.b16 %v595
        %v1371 = vunpack.c.l.b16 %v596
        %v1372 = vunpack.c.l.b16 %v597
        %v1373 = vunpack.c.l.b16 %v598
        %v1374 = vunpack.c.l.b16 %v599
        %v1375 = vunpack.c.l.b16 %v600
        %v1376 = vunpack.c.l.b16 %v601
        %v1377 = vunpack.c.l.b16 %v602
        %v1378 = vunpack.c.l.b16 %v603
        %v1379 = vunpack.c.l.b16 %v604
        %v1380 = vunpack.c.l.b16 %v605
        %v1381 = vunpack.c.l.b16 %v606
        %v1382 = vunpack.c.l.b16 %v607
        %v1383 = vunpack.c.l.b16 %v608
        %v1384 = vunpack.c.l.b16 %v609
        %v1385 = vunpack.c.l.b16 %v610
        %v1386 = vunpack.c.l.b16 %v611
        %v1387 = vunpack.c.l.b16 %v612
        %v1388 = vunpack.c.l.b16 %v613
        %v1389 = vunpack.c.l.b16 %v614
        %v1390 = vunpack.c.l.b16 %v615
        %v1391 = vunpack.c.l.b16 %v616
        %v1392 = vunpack.c.l.b16 %v617
        %v1393 = vunpack.c.l.b16 %v618
        %v1394 = vunpack.c.l.b16 %v619
        %v1395 = vunpack.c.l.b16 %v620
        %v1396 = vunpack.c.l.b16 %v621
        %v1397 = vunpack.c.l.b16 %v622
        %v1398 = vunpack.c.l.b16 %v623
        %v1399 = vunpack.c.l.b16 %v624
        %v1400 = vunpack.c.l.b16 %v625
        %v1401 = vunpack.c.l.b16 %v626
        %v1402 = vunpack.c.l.b16 %v627
        %v1403 = vunpack.c.l.b16 %v628
        %v1404 = vunpack.c.l.b16 %v629
        %v1405 = vunpack.c.l.b16 %v630
        %v1406 = vunpack.c.l.b16 %v631
        %v1407 = vunpack.c.l.b16 %v632
        %v1408 = vunpack.c.l.b16 %v633
        %v1409 = vunpack.c.l.b16 %v634
        %v1410 = vunpack.c.l.b16 %v635
        %v1411 = vunpack.c.l.b16 %v636
        %v1412 = vunpack.c.l.b16 %v637
        %v1413 = vunpack.c.l.b16 %v638
        %v1414 = vunpack.c.l.b16 %v639
        %v1415 = vunpack.c.l.b16 %v640
        %v1416 = vunpack.c.l.b16 %v641
        %v1417 = vunpack.c.l.b16 %v642
        %v1418 = vunpack.c.l.b16 %v643
        %v1419 = vunpack.c.l.b16 %v644
        %v1420 = vunpack.c.l.b16 %v645
        %v1421 = vunpack.c.l.b16 %v646
        %v1422 = vunpack.c.l.b16 %v647
        %v1423 = vunpack.c.l.b16 %v648
        %v1424 = vunpack.c.l.b16 %v649
        %v1425 = vunpack.c.l.b16 %v650
        %v1426 = vunpack.c.l.b16 %v651
        %v1427 = vunpack.c.l.b16 %v652
        %v1428 = vunpack.c.l.b16 %v653
        %v1429 = vunpack.c.l.b16 %v654
        %v1430 = vunpack.c.l.b16 %v655
        %v1431 = vunpack.c.l.b16 %v656
        %v1432 = vunpack.c.l.b16 %v657
        %v1433 = vunpack.c.l.b16 %v658
        %v1434 = vunpack.c.l.b16 %v659
        %v1435 = vunpack.c.l.b16 %v660
        %v1436 = vunpack.c.l.b16 %v661
        %v1437 = vunpack.c.l.b16 %v662
        %v1438 = vunpack.c.l.b16 %v663
        %v1439 = vunpack.c.l.b16 %v664
        %v1440 = vunpack.c.l.b16 %v665
        %v1441 = vunpack.c.l.b16 %v666
        %v1442 = vunpack.c.l.b16 %v667
        %v1443 = vunpack.c.l.b16 %v668
        %v1444 = vunpack.c.l.b16 %v669
        %v1445 = vunpack.c.l.b16 %v670
        %v1446 = vunpack.c.l.b16 %v671
        %v1447 = vunpack.c.l.b16 %v672
        %v1448 = vunpack.c.l.b16 %v673
        %v1449 = vunpack.c.l.b16 %v674
        %v1450 = vunpack.c.l.b16 %v675
        %v1451 = vunpack.c.l.b16 %v676
        %v1452 = vunpack.c.l.b16 %v677
        %v1453 = vunpack.c.l.b16 %v678
        %v1454 = vunpack.c.l.b16 %v679
        %v1455 = vunpack.c.l.b16 %v680
        %v1456 = vunpack.c.l.b16 %v681
        %v1457 = vunpack.c.l.b16 %v682
        %v1458 = vunpack.c.l.b16 %v683
        %v1459 = vunpack.c.l.b16 %v684
        %v1460 = vunpack.c.l.b16 %v685
        %v1461 = vunpack.c.l.b16 %v686
        %v1462 = vunpack.c.l.b16 %v687
        %v1463 = vunpack.c.l.b16 %v688
        %v1464 = vunpack.c.l.b16 %v689
        %v1465 = vunpack.c.l.b16 %v690
        %v1466 = vunpack.c.l.b16 %v691
        %v1467 = vunpack.c.l.b16 %v692
        %v1468 = vunpack.c.l.b16 %v693
        %v1469 = vunpack.c.l.b16 %v694
        %v1470 = vunpack.c.l.b16 %v695
        %v1471 = vunpack.c.l.b16 %v696
        %v1472 = vunpack.c.l.b16 %v697
        %v1473 = vunpack.c.l.b16 %v698
        %v1474 = vunpack.c.l.b16 %v699
        %v1475 = vunpack.c.l.b16 %v700
        %v1476 = vunpack.c.l.b16 %v701
        %v1477 = vunpack.c.l.b16 %v702
        %v1478 = vunpack.c.l.b16 %v703
        %v1479 = vunpack.c.l.b16 %v704
        %v1480 = vunpack.c.l.b16 %v705
        %v1481 = vunpack.c.l.b16 %v706
        %v1482 = vunpack.c.l.b16 %v707
        %v1483 = vunpack.c.l.b16 %v708
        %v1484 = vunpack.c.l.b16 %v709
        %v1485 = vunpack.c.l.b16 %v710
        %v1486 = vunpack.c.l.b16 %v711
        %v1487 = vunpack.c.l.b16 %v712
        %v1488 = vunpack.c.l.b16 %v713
        %v1489 = vunpack.c.l.b16 %v714
        %v1490 = vunpack.c.l.b16 %v715
        %v1491 = vunpack.c.l.b16 %v716
        %v1492 = vunpack.c.l.b16 %v717
        %v1493 = vunpack.c.l.b16 %v718
        %v1494 = vunpack.c.l.b16 %v719
        %v1495 = vunpack.c.l.b16 %v720
        %v1496 = vunpack.c.l.b16 %v721
        %v1497 = vunpack.c.l.b16 %v722
        %v1498 = vunpack.c.l.b16 %v723
        %v1499 = vunpack.c.l.b16 %v724
        %v1500 = vunpack.c.l.b16 %v725
        %v1501 = vunpack.c.l.b16 %v726
        %v1502 = vunpack.c.l.b16 %v727
        %v1503 = vunpack.c.l.b16 %v728
        %v1504 = vunpack.c.l.b16 %v729
        %v1505 = vunpack.c.l.b16 %v730
        %v1506 = vunpack.c.l.b16 %v731
        %v1507 = vunpack.c.l.b16 %v732
        %v1508 = vunpack.c.l.b16 %v733
        %v1509 = vunpack.c.l.b16 %v734
        %v1510 = vunpack.c.l.b16 %v735
        %v1511 = vunpack.c.l.b16 %v736
        %v1512 = vunpack.c.l.b16 %v737
        %v1513 = vunpack.c.l.b16 %v738
        %v1514 = vunpack.c.l.b16 %v739
        %v1515 = vunpack.c.l.b16 %v740
        %v1516 = vunpack.c.l.b16 %v741
        %v1517 = vunpack.c.l.b16 %v742
        %v1518 = vunpack.c.l.b16 %v743
        %v1519 = vunpack.c.l.b16 %v744
        %v1520 = vunpack.c.l.b16 %v745
        %v1521 = vunpack.c.l.b16 %v746
        %v1522 = vunpack.c.l.b16 %v747
        %v1523 = vunpack.c.l.b16 %v748
        %v1524 = vunpack.c.l.b16 %v749
        %v1525 = vunpack.c.l.b16 %v750
        %v1526 = vunpack.c.l.b16 %v751
        %v1527 = vunpack.c.l.b16 %v752
        %v1528 = vunpack.c.l.b16 %v753
        %v1529 = vunpack.c.l.b16 %v754
        %v1530 = vunpack.c.l.b16 %v755
        %v1531 = vunpack.c.l.b16 %v756
        %v1532 = vunpack.c.l.b16 %v757
        %v1533 = vunpack.c.l.b16 %v758
        %v1534 = vunpack.c.l.b16 %v759
        %v1535 = vunpack.c.l.b16 %v760
        %v1536 = vunpack.c.l.b16 %v761
        %v1537 = vunpack.c.l.b16 %v762
        %v1538 = vunpack.c.l.b16 %v763
        %v1539 = vunpack.c.l.b16 %v764
        %v1540 = vunpack.c.l.b16 %v765
        %v1541 = vunpack.c.l.b16 %v766
        %v1542 = vunpack.c.l.b16 %v767
        %v1543 = vunpack.c.l.b16 %v768
        %v1544 = vunpack.c.l.b16 %v769
        %v1545 = vunpack.c.l.b16 %v770
        %v1546 = vunpack.c.l.b16 %v771
        %v1547 = vunpack.c.l.b16 %v772
        %v1548 = vunpack.c.l.b16 %v773
        %v1549 = vunpack.c.l.b16 %v774
        %v1550 = vunpack.c.l.b16 %v775
        %v1551 = vunpack.c.l.b16 %v776
        %v1552 = vunpack.c.l.b16 %v777
        %v1553 = vunpack.c.l.b16 %v778
        %v1554 = vunpack.c.l.b16 %v779
        %v1555 = vunpack.c.l.b16 %v780
        %v1556 = vunpack.c.l.b16 %v781
        %v1557 = vunpack.c.l.b16 %v782
        %v1558 = vunpack.c.l.b16 %v783
        %v1559 = vunpack.c.l.b16 %v784
        %v1560 = vunpack.c.l.b16 %v785
        %v1561 = vunpack.c.l.b16 %v786
        %v1562 = vunpack.c.l.b16 %v787
        %v1563 = vunpack.c.l.b16 %v788
        %v1564 = vunpack.c.l.b16 %v789
        %v1565 = vunpack.c.l.b16 %v790
        %v1566 = vunpack.c.l.b16 %v791
        %v1567 = vunpack.c.l.b16 %v792
        %v1568 = vunpack.c.l.b16 %v793
        %v1569 = vunpack.c.l.b16 %v794
        %v1570 = vunpack.c.l.b16 %v795
        %v1571 = vunpack.c.l.b16 %v796
        %v1572 = vunpack.c.l.b16 %v797
        %v1573 = vunpack.c.l.b16 %v798
        %v1574 = vunpack.c.l.b16 %v799
        %v1575 = vunpack.c.l.b16 %v800
        %v1576 = vpack.c.b16 %v1193, %v1192
        %v1577 = vpack.c.b16 %v1195, %v1194
        %v1578 = vpack.c.b16 %v1197, %v1196
        %v1579 = vpack.c.b16 %v1199, %v1198
        %v1580 = vpack.c.b16 %v1201, %v1200
        %v1581 = vpack.c.b16 %v1203, %v1202
        %v1582 = vpack.c.b16 %v1205, %v1204
        %v1583 = vpack.c.b16 %v1207, %v1206
        %v1584 = vpack.c.b16 %v1209, %v1208
        %v1585 = vpack.c.b16 %v1211, %v1210
        %v1586 = vpack.c.b16 %v1213, %v1212
        %v1587 = vpack.c.b16 %v1215, %v1214
        %v1588 = vpack.c.b16 %v1217, %v1216
        %v1589 = vpack.c.b16 %v1219, %v1218
        %v1590 = vpack.c.b16 %v1221, %v1220
        %v1591 = vpack.c.b16 %v1223, %v1222
        %v1592 = vpack.c.b16 %v1225, %v1224
        %v1593 = vpack.c.b16 %v1227, %v1226
        %v1594 = vpack.c.b16 %v1229, %v1228
        %v1595 = vpack.c.b16 %v1231, %v1230
        %v1596 = vpack.c.b16 %v1233, %v1232
        %v1597 = vpack.c.b16 %v1235, %v1234
        %v1598 = vpack.c.b16 %v1237, %v1236
        %v1599 = vpack.c.b16 %v1239, %v1238
        %v1600 = vpack.c.b16 %v1241, %v1240
        %v1601 = vpack.c.b16 %v1243, %v1242
        %v1602 = vpack.c.b16 %v1245, %v1244
        %v1603 = vpack.c.b16 %v1247, %v1246
        %v1604 = vpack.c.b16 %v1249, %v1248
        %v1605 = vpack.c.b16 %v1251, %v1250
        %v1606 = vpack.c.b16 %v1253, %v1252
        %v1607 = vpack.c.b16 %v1255, %v1254
        %v1608 = vpack.c.b16 %v1257, %v1256
        %v1609 = vpack.c.b16 %v1259, %v1258
        %v1610 = vpack.c.b16 %v1261, %v1260
        %v1611 = vpack.c.b16 %v1263, %v1262
        %v1612 = vpack.c.b16 %v1265, %v1264
        %v1613 = vpack.c.b16 %v1267, %v1266
        %v1614 = vpack.c.b16 %v1269, %v1268
        %v1615 = vpack.c.b16 %v1271, %v1270
        %v1616 = vpack.c.b16 %v1273, %v1272
        %v1617 = vpack.c.b16 %v1275, %v1274
        %v1618 = vpack.c.b16 %v1277, %v1276
        %v1619 = vpack.c.b16 %v1279, %v1278
        %v1620 = vpack.c.b16 %v1281, %v1280
        %v1621 = vpack.c.b16 %v1283, %v1282
        %v1622 = vpack.c.b16 %v1285, %v1284
        %v1623 = vpack.c.b16 %v1287, %v1286
        %v1624 = vpack.c.b16 %v1289, %v1288
        %v1625 = vpack.c.b16 %v1291, %v1290
        %v1626 = vpack.c.b16 %v1293, %v1292
        %v1627 = vpack.c.b16 %v1295, %v1294
        %v1628 = vpack.c.b16 %v1297, %v1296
        %v1629 = vpack.c.b16 %v1299, %v1298
        %v1630 = vpack.c.b16 %v1301, %v1300
        %v1631 = vpack.c.b16 %v1303, %v1302
        %v1632 = vpack.c.b16 %v1305, %v1304
        %v1633 = vpack.c.b16 %v1307, %v1306
        %v1634 = vpack.c.b16 %v1309, %v1308
        %v1635 = vpack.c.b16 %v1311, %v1310
        %v1636 = vpack.c.b16 %v1313, %v1312
        %v1637 = vpack.c.b16 %v1315, %v1314
        %v1638 = vpack.c.b16 %v1317, %v1316
        %v1639 = vpack.c.b16 %v1319, %v1318
        %v1640 = vpack.c.b16 %v1321, %v1320
        %v1641 = vpack.c.b16 %v1323, %v1322
        %v1642 = vpack.c.b16 %v1325, %v1324
        %v1643 = vpack.c.b16 %v1327, %v1326
        %v1644 = vpack.c.b16 %v1329, %v1328
        %v1645 = vpack.c.b16 %v1331, %v1330
        %v1646 = vpack.c.b16 %v1333, %v1332
        %v1647 = vpack.c.b16 %v1335, %v1334
        %v1648 = vpack.c.b16 %v1337, %v1336
        %v1649 = vpack.c.b16 %v1339, %v1338
        %v1650 = vpack.c.b16 %v1341, %v1340
        %v1651 = vpack.c.b16 %v1343, %v1342
        %v1652 = vpack.c.b16 %v1345, %v1344
        %v1653 = vpack.c.b16 %v1347, %v1346
        %v1654 = vpack.c.b16 %v1349, %v1348
        %v1655 = vpack.c.b16 %v1351, %v1350
        %v1656 = vpack.c.b16 %v1353, %v1352
        %v1657 = vpack.c.b16 %v1355, %v1354
        %v1658 = vpack.c.b16 %v1357, %v1356
        %v1659 = vpack.c.b16 %v1359, %v1358
        %v1660 = vpack.c.b16 %v1361, %v1360
        %v1661 = vpack.c.b16 %v1363, %v1362
        %v1662 = vpack.c.b16 %v1365, %v1364
        %v1663 = vpack.c.b16 %v1367, %v1366
        %v1664 = vpack.c.b16 %v1369, %v1368
        %v1665 = vpack.c.b16 %v1371, %v1370
        %v1666 = vpack.c.b16 %v1373, %v1372
        %v1667 = vpack.c.b16 %v1375, %v1374
        %v1668 = vpack.c.b16 %v1377, %v1376
        %v1669 = vpack.c.b16 %v1379, %v1378
        %v1670 = vpack.c.b16 %v1381, %v1380
        %v1671 = vpack.c.b16 %v1383, %v1382
        %v1672 = vpack.c.b16 %v1385, %v1384
        %v1673 = vpack.c.b16 %v1387, %v1386
        %v1674 = vpack.c.b16 %v1389, %v1388
        %v1675 = vpack.c.b16 %v1391, %v1390
        %v1676 = vpack.c.b16 %v1393, %v1392
        %v1677 = vpack.c.b16 %v1395, %v1394
        %v1678 = vpack.c.b16 %v1397, %v1396
        %v1679 = vpack.c.b16 %v1399, %v1398
        %v1680 = vpack.c.b16 %v1401, %v1400
        %v1681 = vpack.c.b16 %v1403, %v1402
        %v1682 = vpack.c.b16 %v1405, %v1404
        %v1683 = vpack.c.b16 %v1407, %v1406
        %v1684 = vpack.c.b16 %v1409, %v1408
        %v1685 = vpack.c.b16 %v1411, %v1410
        %v1686 = vpack.c.b16 %v1413, %v1412
        %v1687 = vpack.c.b16 %v1415, %v1414
        %v1688 = vpack.c.b16 %v1417, %v1416
        %v1689 = vpack.c.b16 %v1419, %v1418
        %v1690 = vpack.c.b16 %v1421, %v1420
        %v1691 = vpack.c.b16 %v1423, %v1422
        %v1692 = vpack.c.b16 %v1425, %v1424
        %v1693 = vpack.c.b16 %v1427, %v1426
        %v1694 = vpack.c.b16 %v1429, %v1428
        %v1695 = vpack.c.b16 %v1431, %v1430
        %v1696 = vpack.c.b16 %v1433, %v1432
        %v1697 = vpack.c.b16 %v1435, %v1434
        %v1698 = vpack.c.b16 %v1437, %v1436
        %v1699 = vpack.c.b16 %v1439, %v1438
        %v1700 = vpack.c.b16 %v1441, %v1440
        %v1701 = vpack.c.b16 %v1443, %v1442
        %v1702 = vpack.c.b16 %v1445, %v1444
        %v1703 = vpack.c.b16 %v1447, %v1446
        %v1704 = vpack.c.b16 %v1449, %v1448
        %v1705 = vpack.c.b16 %v1451, %v1450
        %v1706 = vpack.c.b16 %v1453, %v1452
        %v1707 = vpack.c.b16 %v1455, %v1454
        %v1708 = vpack.c.b16 %v1457, %v1456
        %v1709 = vpack.c.b16 %v1459, %v1458
        %v1710 = vpack.c.b16 %v1461, %v1460
        %v1711 = vpack.c.b16 %v1463, %v1462
        %v1712 = vpack.c.b16 %v1465, %v1464
        %v1713 = vpack.c.b16 %v1467, %v1466
        %v1714 = vpack.c.b16 %v1469, %v1468
        %v1715 = vpack.c.b16 %v1471, %v1470
        %v1716 = vpack.c.b16 %v1473, %v1472
        %v1717 = vpack.c.b16 %v1475, %v1474
        %v1718 = vpack.c.b16 %v1477, %v1476
        %v1719 = vpack.c.b16 %v1479, %v1478
        %v1720 = vpack.c.b16 %v1481, %v1480
        %v1721 = vpack.c.b16 %v1483, %v1482
        %v1722 = vpack.c.b16 %v1485, %v1484
        %v1723 = vpack.c.b16 %v1487, %v1486
        %v1724 = vpack.c.b16 %v1489, %v1488
        %v1725 = vpack.c.b16 %v1491, %v1490
        %v1726 = vpack.c.b16 %v1493, %v1492
        %v1727 = vpack.c.b16 %v1495, %v1494
        %v1728 = vpack.c.b16 %v1497, %v1496
        %v1729 = vpack.c.b16 %v1499, %v1498
        %v1730 = vpack.c.b16 %v1501, %v1500
        %v1731 = vpack.c.b16 %v1503, %v1502
        %v1732 = vpack.c.b16 %v1505, %v1504
        %v1733 = vpack.c.b16 %v1507, %v1506
        %v1734 = vpack.c.b16 %v1509, %v1508
        %v1735 = vpack.c.b16 %v1511, %v1510
        %v1736 = vpack.c.b16 %v1513, %v1512
        %v1737 = vpack.c.b16 %v1515, %v1514
        %v1738 = vpack.c.b16 %v1517, %v1516
        %v1739 = vpack.c.b16 %v1519, %v1518
        %v1740 = vpack.c.b16 %v1521, %v1520
        %v1741 = vpack.c.b16 %v1523, %v1522
        %v1742 = vpack.c.b16 %v1525, %v1524
        %v1743 = vpack.c.b16 %v1527, %v1526
        %v1744 = vpack.c.b16 %v1529, %v1528
        %v1745 = vpack.c.b16 %v1531, %v1530
        %v1746 = vpack.c.b16 %v1533, %v1532
        %v1747 = vpack.c.b16 %v1535, %v1534
        %v1748 = vpack.c.b16 %v1537, %v1536
        %v1749 = vpack.c.b16 %v1539, %v1538
        %v1750 = vpack.c.b16 %v1541, %v1540
        %v1751 = vpack.c.b16 %v1543, %v1542
        %v1752 = vpack.c.b16 %v1545, %v1544
        %v1753 = vpack.c.b16 %v1547, %v1546
        %v1754 = vpack.c.b16 %v1549, %v1548
        %v1755 = vpack.c.b16 %v1551, %v1550
        %v1756 = vpack.c.b16 %v1553, %v1552
        %v1757 = vpack.c.b16 %v1555, %v1554
        %v1758 = vpack.c.b16 %v1557, %v1556
        %v1759 = vpack.c.b16 %v1559, %v1558
        %v1760 = vpack.c.b16 %v1561, %v1560
        %v1761 = vpack.c.b16 %v1563, %v1562
        %v1762 = vpack.c.b16 %v1565, %v1564
        %v1763 = vpack.c.b16 %v1567, %v1566
        %v1764 = vpack.c.b16 %v1569, %v1568
        %v1765 = vpack.c.b16 %v1571, %v1570
        %v1766 = vpack.c.b16 %v1573, %v1572
        %v1767 = vpack.c.b16 %v1575, %v1574
        %1960 = vmatprep.subr.bf16.mxu0 0
        %1961 = vmatpush1.bf16.msra.mxu0 %v1576
        %1962 = vmatprep.subr.bf16.mxu0 0
        %1963 = vmatpush1.bf16.msra.mxu0 %v1577
        %1964 = vmatprep.subr.bf16.mxu0 0
        %1965 = vmatpush1.bf16.msra.mxu0 %v1578
        %1966 = vmatprep.subr.bf16.mxu0 0
        %1967 = vmatpush1.bf16.msra.mxu0 %v1579
        %1968 = vmatprep.subr.bf16.mxu0 0
        %1969 = vmatpush1.bf16.msra.mxu0 %v1580
        %1970 = vmatprep.subr.bf16.mxu0 0
        %1971 = vmatpush1.bf16.msra.mxu0 %v1581
        %1972 = vmatprep.subr.bf16.mxu0 0
        %1973 = vmatpush1.bf16.msra.mxu0 %v1582
        %1974 = vmatprep.subr.bf16.mxu0 0
        %1975 = vmatpush1.bf16.msra.mxu0 %v1583
        %1976 = vmatprep.subr.bf16.mxu0 0
        %1977 = vmatpush1.bf16.msra.mxu0 %v1584
        %1978 = vmatprep.subr.bf16.mxu0 0
        %1979 = vmatpush1.bf16.msra.mxu0 %v1585
        %1980 = vmatprep.subr.bf16.mxu0 0
        %1981 = vmatpush1.bf16.msra.mxu0 %v1586
        %1982 = vmatprep.subr.bf16.mxu0 0
        %1983 = vmatpush1.bf16.msra.mxu0 %v1587
        %1984 = vmatprep.subr.bf16.mxu0 0
        %1985 = vmatpush1.bf16.msra.mxu0 %v1588
        %1986 = vmatprep.subr.bf16.mxu0 0
        %1987 = vmatpush1.bf16.msra.mxu0 %v1589
        %1988 = vmatprep.subr.bf16.mxu0 0
        %1989 = vmatpush1.bf16.msra.mxu0 %v1590
        %1990 = vmatprep.subr.bf16.mxu0 0
        %1991 = vmatpush1.bf16.msra.mxu0 %v1591
        %1992 = vmatprep.mubr.bf16.mxu0 %v394
        %1993 = vmatmul.mubr.bf16.gmra.mrb[0].mxu0 %v393
        %v1994 = vpop.f32.mrb[0].mxu0
        %v1995 = vadd.f32 %v806, %v1994
        %v1996 = vpop.f32.mrb[0].mxu0
        %v1997 = vpop.f32.mrb[0].mxu0
        %v1998 = vadd.f32 %v806, %v1997
        %v1999 = vpop.f32.mrb[0].mxu0
        %2000 = vdwg.mxu0
        %2001 = vmatprep.subr.bf16.mxu0 0
        %2002 = vmatpush1.bf16.msra.mxu0 %v1592
        %2003 = vmatprep.subr.bf16.mxu0 0
        %2004 = vmatpush1.bf16.msra.mxu0 %v1593
        %2005 = vmatprep.subr.bf16.mxu0 0
        %2006 = vmatpush1.bf16.msra.mxu0 %v1594
        %2007 = vmatprep.subr.bf16.mxu0 0
        %2008 = vmatpush1.bf16.msra.mxu0 %v1595
        %2009 = vmatprep.subr.bf16.mxu0 0
        %2010 = vmatpush1.bf16.msra.mxu0 %v1596
        %2011 = vmatprep.subr.bf16.mxu0 0
        %2012 = vmatpush1.bf16.msra.mxu0 %v1597
        %2013 = vmatprep.subr.bf16.mxu0 0
        %2014 = vmatpush1.bf16.msra.mxu0 %v1598
        %2015 = vmatprep.subr.bf16.mxu0 0
        %2016 = vmatpush1.bf16.msra.mxu0 %v1599
        %2017 = vmatprep.subr.bf16.mxu0 0
        %2018 = vmatpush1.bf16.msra.mxu0 %v1600
        %2019 = vmatprep.subr.bf16.mxu0 0
        %2020 = vmatpush1.bf16.msra.mxu0 %v1601
        %2021 = vmatprep.subr.bf16.mxu0 0
        %2022 = vmatpush1.bf16.msra.mxu0 %v1602
        %2023 = vmatprep.subr.bf16.mxu0 0
        %2024 = vmatpush1.bf16.msra.mxu0 %v1603
        %2025 = vmatprep.subr.bf16.mxu0 0
        %2026 = vmatpush1.bf16.msra.mxu0 %v1604
        %2027 = vmatprep.subr.bf16.mxu0 0
        %2028 = vmatpush1.bf16.msra.mxu0 %v1605
        %2029 = vmatprep.subr.bf16.mxu0 0
        %2030 = vmatpush1.bf16.msra.mxu0 %v1606
        %2031 = vmatprep.subr.bf16.mxu0 0
        %2032 = vmatpush1.bf16.msra.mxu0 %v1607
        %2033 = vmatprep.mubr.bf16.mxu0 %v396
        %2034 = vmatmul.mubr.bf16.gmra.mrb[0].mxu0 %v395
        %v2035 = vpop.f32.mrb[0].mxu0
        %v2036 = vadd.f32 %v1995, %v2035
        %v2037 = vpop.f32.mrb[0].mxu0
        %v2038 = vpop.f32.mrb[0].mxu0
        %v2039 = vadd.f32 %v1998, %v2038
        %v2040 = vpop.f32.mrb[0].mxu0
        %2041 = vdwg.mxu0
        %2042 = vmatprep.subr.bf16.mxu0 0
        %2043 = vmatpush1.bf16.msra.mxu0 %v1608
        %2044 = vmatprep.subr.bf16.mxu0 0
        %2045 = vmatpush1.bf16.msra.mxu0 %v1609
        %2046 = vmatprep.subr.bf16.mxu0 0
        %2047 = vmatpush1.bf16.msra.mxu0 %v1610
        %2048 = vmatprep.subr.bf16.mxu0 0
        %2049 = vmatpush1.bf16.msra.mxu0 %v1611
        %2050 = vmatprep.subr.bf16.mxu0 0
        %2051 = vmatpush1.bf16.msra.mxu0 %v1612
        %2052 = vmatprep.subr.bf16.mxu0 0
        %2053 = vmatpush1.bf16.msra.mxu0 %v1613
        %2054 = vmatprep.subr.bf16.mxu0 0
        %2055 = vmatpush1.bf16.msra.mxu0 %v1614
        %2056 = vmatprep.subr.bf16.mxu0 0
        %2057 = vmatpush1.bf16.msra.mxu0 %v1615
        %2058 = vmatprep.subr.bf16.mxu0 0
        %2059 = vmatpush1.bf16.msra.mxu0 %v1616
        %2060 = vmatprep.subr.bf16.mxu0 0
        %2061 = vmatpush1.bf16.msra.mxu0 %v1617
        %2062 = vmatprep.subr.bf16.mxu0 0
        %2063 = vmatpush1.bf16.msra.mxu0 %v1618
        %2064 = vmatprep.subr.bf16.mxu0 0
        %2065 = vmatpush1.bf16.msra.mxu0 %v1619
        %2066 = vmatprep.subr.bf16.mxu0 0
        %2067 = vmatpush1.bf16.msra.mxu0 %v1620
        %2068 = vmatprep.subr.bf16.mxu0 0
        %2069 = vmatpush1.bf16.msra.mxu0 %v1621
        %2070 = vmatprep.subr.bf16.mxu0 0
        %2071 = vmatpush1.bf16.msra.mxu0 %v1622
        %2072 = vmatprep.subr.bf16.mxu0 0
        %2073 = vmatpush1.bf16.msra.mxu0 %v1623
        %2074 = vmatprep.mubr.bf16.mxu0 %v398
        %2075 = vmatmul.mubr.bf16.gmra.mrb[0].mxu0 %v397
        %v2076 = vpop.f32.mrb[0].mxu0
        %v2077 = vadd.f32 %v2036, %v2076
        %v2078 = vpop.f32.mrb[0].mxu0
        %v2079 = vpop.f32.mrb[0].mxu0
        %v2080 = vadd.f32 %v2039, %v2079
        %v2081 = vpop.f32.mrb[0].mxu0
        %2082 = vdwg.mxu0
        %2083 = vmatprep.subr.bf16.mxu0 0
        %2084 = vmatpush1.bf16.msra.mxu0 %v1624
        %2085 = vmatprep.subr.bf16.mxu0 0
        %2086 = vmatpush1.bf16.msra.mxu0 %v1625
        %2087 = vmatprep.subr.bf16.mxu0 0
        %2088 = vmatpush1.bf16.msra.mxu0 %v1626
        %2089 = vmatprep.subr.bf16.mxu0 0
        %2090 = vmatpush1.bf16.msra.mxu0 %v1627
        %2091 = vmatprep.subr.bf16.mxu0 0
        %2092 = vmatpush1.bf16.msra.mxu0 %v1628
        %2093 = vmatprep.subr.bf16.mxu0 0
        %2094 = vmatpush1.bf16.msra.mxu0 %v1629
        %2095 = vmatprep.subr.bf16.mxu0 0
        %2096 = vmatpush1.bf16.msra.mxu0 %v1630
        %2097 = vmatprep.subr.bf16.mxu0 0
        %2098 = vmatpush1.bf16.msra.mxu0 %v1631
        %2099 = vmatprep.subr.bf16.mxu0 0
        %2100 = vmatpush1.bf16.msra.mxu0 %v1632
        %2101 = vmatprep.subr.bf16.mxu0 0
        %2102 = vmatpush1.bf16.msra.mxu0 %v1633
        %2103 = vmatprep.subr.bf16.mxu0 0
        %2104 = vmatpush1.bf16.msra.mxu0 %v1634
        %2105 = vmatprep.subr.bf16.mxu0 0
        %2106 = vmatpush1.bf16.msra.mxu0 %v1635
        %2107 = vmatprep.subr.bf16.mxu0 0
        %2108 = vmatpush1.bf16.msra.mxu0 %v1636
        %2109 = vmatprep.subr.bf16.mxu0 0
        %2110 = vmatpush1.bf16.msra.mxu0 %v1637
        %2111 = vmatprep.subr.bf16.mxu0 0
        %2112 = vmatpush1.bf16.msra.mxu0 %v1638
        %2113 = vmatprep.subr.bf16.mxu0 0
        %2114 = vmatpush1.bf16.msra.mxu0 %v1639
        %2115 = vmatprep.mubr.bf16.mxu0 %v400
        %2116 = vmatmul.mubr.bf16.gmra.mrb[0].mxu0 %v399
        %v2117 = vpop.f32.mrb[0].mxu0
        %v2118 = vadd.f32 %v2077, %v2117
        %v2119 = vpop.f32.mrb[0].mxu0
        %v2120 = vpop.f32.mrb[0].mxu0
        %v2121 = vadd.f32 %v2080, %v2120
        %v2122 = vpop.f32.mrb[0].mxu0
        %2123 = vdwg.mxu0
        %2124 = vmatprep.subr.bf16.mxu0 0
        %2125 = vmatpush1.bf16.msra.mxu0 %v1640
        %2126 = vmatprep.subr.bf16.mxu0 0
        %2127 = vmatpush1.bf16.msra.mxu0 %v1641
        %2128 = vmatprep.subr.bf16.mxu0 0
        %2129 = vmatpush1.bf16.msra.mxu0 %v1642
        %2130 = vmatprep.subr.bf16.mxu0 0
        %2131 = vmatpush1.bf16.msra.mxu0 %v1643
        %2132 = vmatprep.subr.bf16.mxu0 0
        %2133 = vmatpush1.bf16.msra.mxu0 %v1644
        %2134 = vmatprep.subr.bf16.mxu0 0
        %2135 = vmatpush1.bf16.msra.mxu0 %v1645
        %2136 = vmatprep.subr.bf16.mxu0 0
        %2137 = vmatpush1.bf16.msra.mxu0 %v1646
        %2138 = vmatprep.subr.bf16.mxu0 0
        %2139 = vmatpush1.bf16.msra.mxu0 %v1647
        %2140 = vmatprep.subr.bf16.mxu0 0
        %2141 = vmatpush1.bf16.msra.mxu0 %v1648
        %2142 = vmatprep.subr.bf16.mxu0 0
        %2143 = vmatpush1.bf16.msra.mxu0 %v1649
        %2144 = vmatprep.subr.bf16.mxu0 0
        %2145 = vmatpush1.bf16.msra.mxu0 %v1650
        %2146 = vmatprep.subr.bf16.mxu0 0
        %2147 = vmatpush1.bf16.msra.mxu0 %v1651
        %2148 = vmatprep.subr.bf16.mxu0 0
        %2149 = vmatpush1.bf16.msra.mxu0 %v1652
        %2150 = vmatprep.subr.bf16.mxu0 0
        %2151 = vmatpush1.bf16.msra.mxu0 %v1653
        %2152 = vmatprep.subr.bf16.mxu0 0
        %2153 = vmatpush1.bf16.msra.mxu0 %v1654
        %2154 = vmatprep.subr.bf16.mxu0 0
        %2155 = vmatpush1.bf16.msra.mxu0 %v1655
        %2156 = vmatprep.mubr.bf16.mxu0 %v402
        %2157 = vmatmul.mubr.bf16.gmra.mrb[0].mxu0 %v401
        %v2158 = vpop.f32.mrb[0].mxu0
        %v2159 = vadd.f32 %v2118, %v2158
        %v2160 = vpop.f32.mrb[0].mxu0
        %v2161 = vpop.f32.mrb[0].mxu0
        %v2162 = vadd.f32 %v2121, %v2161
        %v2163 = vpop.f32.mrb[0].mxu0
        %2164 = vdwg.mxu0
        %2165 = vmatprep.subr.bf16.mxu0 0
        %2166 = vmatpush1.bf16.msra.mxu0 %v1656
        %2167 = vmatprep.subr.bf16.mxu0 0
        %2168 = vmatpush1.bf16.msra.mxu0 %v1657
        %2169 = vmatprep.subr.bf16.mxu0 0
        %2170 = vmatpush1.bf16.msra.mxu0 %v1658
        %2171 = vmatprep.subr.bf16.mxu0 0
        %2172 = vmatpush1.bf16.msra.mxu0 %v1659
        %2173 = vmatprep.subr.bf16.mxu0 0
        %2174 = vmatpush1.bf16.msra.mxu0 %v1660
        %2175 = vmatprep.subr.bf16.mxu0 0
        %2176 = vmatpush1.bf16.msra.mxu0 %v1661
        %2177 = vmatprep.subr.bf16.mxu0 0
        %2178 = vmatpush1.bf16.msra.mxu0 %v1662
        %2179 = vmatprep.subr.bf16.mxu0 0
        %2180 = vmatpush1.bf16.msra.mxu0 %v1663
        %2181 = vmatprep.subr.bf16.mxu0 0
        %2182 = vmatpush1.bf16.msra.mxu0 %v1664
        %2183 = vmatprep.subr.bf16.mxu0 0
        %2184 = vmatpush1.bf16.msra.mxu0 %v1665
        %2185 = vmatprep.subr.bf16.mxu0 0
        %2186 = vmatpush1.bf16.msra.mxu0 %v1666
        %2187 = vmatprep.subr.bf16.mxu0 0
        %2188 = vmatpush1.bf16.msra.mxu0 %v1667
        %2189 = vmatprep.subr.bf16.mxu0 0
        %2190 = vmatpush1.bf16.msra.mxu0 %v1668
        %2191 = vmatprep.subr.bf16.mxu0 0
        %2192 = vmatpush1.bf16.msra.mxu0 %v1669
        %2193 = vmatprep.subr.bf16.mxu0 0
        %2194 = vmatpush1.bf16.msra.mxu0 %v1670
        %2195 = vmatprep.subr.bf16.mxu0 0
        %2196 = vmatpush1.bf16.msra.mxu0 %v1671
        %2197 = vmatprep.mubr.bf16.mxu0 %v404
        %2198 = vmatmul.mubr.bf16.gmra.mrb[0].mxu0 %v403
        %v2199 = vpop.f32.mrb[0].mxu0
        %v2200 = vadd.f32 %v2159, %v2199
        %v2201 = vpop.f32.mrb[0].mxu0
        %v2202 = vpop.f32.mrb[0].mxu0
        %v2203 = vadd.f32 %v2162, %v2202
        %v2204 = vpop.f32.mrb[0].mxu0
        %2205 = vdwg.mxu0
        %2206 = vmatprep.subr.bf16.mxu0 0
        %2207 = vmatpush1.bf16.msra.mxu0 %v1672
        %2208 = vmatprep.subr.bf16.mxu0 0
        %2209 = vmatpush1.bf16.msra.mxu0 %v1673
        %2210 = vmatprep.subr.bf16.mxu0 0
        %2211 = vmatpush1.bf16.msra.mxu0 %v1674
        %2212 = vmatprep.subr.bf16.mxu0 0
        %2213 = vmatpush1.bf16.msra.mxu0 %v1675
        %2214 = vmatprep.subr.bf16.mxu0 0
        %2215 = vmatpush1.bf16.msra.mxu0 %v1676
        %2216 = vmatprep.subr.bf16.mxu0 0
        %2217 = vmatpush1.bf16.msra.mxu0 %v1677
        %2218 = vmatprep.subr.bf16.mxu0 0
        %2219 = vmatpush1.bf16.msra.mxu0 %v1678
        %2220 = vmatprep.subr.bf16.mxu0 0
        %2221 = vmatpush1.bf16.msra.mxu0 %v1679
        %2222 = vmatprep.subr.bf16.mxu0 0
        %2223 = vmatpush1.bf16.msra.mxu0 %v1680
        %2224 = vmatprep.subr.bf16.mxu0 0
        %2225 = vmatpush1.bf16.msra.mxu0 %v1681
        %2226 = vmatprep.subr.bf16.mxu0 0
        %2227 = vmatpush1.bf16.msra.mxu0 %v1682
        %2228 = vmatprep.subr.bf16.mxu0 0
        %2229 = vmatpush1.bf16.msra.mxu0 %v1683
        %2230 = vmatprep.subr.bf16.mxu0 0
        %2231 = vmatpush1.bf16.msra.mxu0 %v1684
        %2232 = vmatprep.subr.bf16.mxu0 0
        %2233 = vmatpush1.bf16.msra.mxu0 %v1685
        %2234 = vmatprep.subr.bf16.mxu0 0
        %2235 = vmatpush1.bf16.msra.mxu0 %v1686
        %2236 = vmatprep.subr.bf16.mxu0 0
        %2237 = vmatpush1.bf16.msra.mxu0 %v1687
        %2238 = vmatprep.mubr.bf16.mxu0 %v406
        %2239 = vmatmul.mubr.bf16.gmra.mrb[0].mxu0 %v405
        %v2240 = vpop.f32.mrb[0].mxu0
        %v2241 = vadd.f32 %v2200, %v2240
        %v2242 = vpop.f32.mrb[0].mxu0
        %v2243 = vpop.f32.mrb[0].mxu0
        %v2244 = vadd.f32 %v2203, %v2243
        %v2245 = vpop.f32.mrb[0].mxu0
        %2246 = vdwg.mxu0
        %2247 = vmatprep.subr.bf16.mxu0 0
        %2248 = vmatpush1.bf16.msra.mxu0 %v1688
        %2249 = vmatprep.subr.bf16.mxu0 0
        %2250 = vmatpush1.bf16.msra.mxu0 %v1689
        %2251 = vmatprep.subr.bf16.mxu0 0
        %2252 = vmatpush1.bf16.msra.mxu0 %v1690
        %2253 = vmatprep.subr.bf16.mxu0 0
        %2254 = vmatpush1.bf16.msra.mxu0 %v1691
        %2255 = vmatprep.subr.bf16.mxu0 0
        %2256 = vmatpush1.bf16.msra.mxu0 %v1692
        %2257 = vmatprep.subr.bf16.mxu0 0
        %2258 = vmatpush1.bf16.msra.mxu0 %v1693
        %2259 = vmatprep.subr.bf16.mxu0 0
        %2260 = vmatpush1.bf16.msra.mxu0 %v1694
        %2261 = vmatprep.subr.bf16.mxu0 0
        %2262 = vmatpush1.bf16.msra.mxu0 %v1695
        %2263 = vmatprep.subr.bf16.mxu0 0
        %2264 = vmatpush1.bf16.msra.mxu0 %v1696
        %2265 = vmatprep.subr.bf16.mxu0 0
        %2266 = vmatpush1.bf16.msra.mxu0 %v1697
        %2267 = vmatprep.subr.bf16.mxu0 0
        %2268 = vmatpush1.bf16.msra.mxu0 %v1698
        %2269 = vmatprep.subr.bf16.mxu0 0
        %2270 = vmatpush1.bf16.msra.mxu0 %v1699
        %2271 = vmatprep.subr.bf16.mxu0 0
        %2272 = vmatpush1.bf16.msra.mxu0 %v1700
        %2273 = vmatprep.subr.bf16.mxu0 0
        %2274 = vmatpush1.bf16.msra.mxu0 %v1701
        %2275 = vmatprep.subr.bf16.mxu0 0
        %2276 = vmatpush1.bf16.msra.mxu0 %v1702
        %2277 = vmatprep.subr.bf16.mxu0 0
        %2278 = vmatpush1.bf16.msra.mxu0 %v1703
        %2279 = vmatprep.mubr.bf16.mxu0 %v408
        %2280 = vmatmul.mubr.bf16.gmra.mrb[0].mxu0 %v407
        %v2281 = vpop.f32.mrb[0].mxu0
        %v2282 = vadd.f32 %v2241, %v2281
        %v2283 = vpop.f32.mrb[0].mxu0
        %v2284 = vpop.f32.mrb[0].mxu0
        %v2285 = vadd.f32 %v2244, %v2284
        %v2286 = vpop.f32.mrb[0].mxu0
        %2287 = vdwg.mxu0
        %2288 = vmatprep.subr.bf16.mxu0 0
        %2289 = vmatpush1.bf16.msra.mxu0 %v1704
        %2290 = vmatprep.subr.bf16.mxu0 0
        %2291 = vmatpush1.bf16.msra.mxu0 %v1705
        %2292 = vmatprep.subr.bf16.mxu0 0
        %2293 = vmatpush1.bf16.msra.mxu0 %v1706
        %2294 = vmatprep.subr.bf16.mxu0 0
        %2295 = vmatpush1.bf16.msra.mxu0 %v1707
        %2296 = vmatprep.subr.bf16.mxu0 0
        %2297 = vmatpush1.bf16.msra.mxu0 %v1708
        %2298 = vmatprep.subr.bf16.mxu0 0
        %2299 = vmatpush1.bf16.msra.mxu0 %v1709
        %2300 = vmatprep.subr.bf16.mxu0 0
        %2301 = vmatpush1.bf16.msra.mxu0 %v1710
        %2302 = vmatprep.subr.bf16.mxu0 0
        %2303 = vmatpush1.bf16.msra.mxu0 %v1711
        %2304 = vmatprep.subr.bf16.mxu0 0
        %2305 = vmatpush1.bf16.msra.mxu0 %v1712
        %2306 = vmatprep.subr.bf16.mxu0 0
        %2307 = vmatpush1.bf16.msra.mxu0 %v1713
        %2308 = vmatprep.subr.bf16.mxu0 0
        %2309 = vmatpush1.bf16.msra.mxu0 %v1714
        %2310 = vmatprep.subr.bf16.mxu0 0
        %2311 = vmatpush1.bf16.msra.mxu0 %v1715
        %2312 = vmatprep.subr.bf16.mxu0 0
        %2313 = vmatpush1.bf16.msra.mxu0 %v1716
        %2314 = vmatprep.subr.bf16.mxu0 0
        %2315 = vmatpush1.bf16.msra.mxu0 %v1717
        %2316 = vmatprep.subr.bf16.mxu0 0
        %2317 = vmatpush1.bf16.msra.mxu0 %v1718
        %2318 = vmatprep.subr.bf16.mxu0 0
        %2319 = vmatpush1.bf16.msra.mxu0 %v1719
        %2320 = vmatprep.mubr.bf16.mxu0 %v410
        %2321 = vmatmul.mubr.bf16.gmra.mrb[0].mxu0 %v409
        %v2322 = vpop.f32.mrb[0].mxu0
        %v2323 = vadd.f32 %v2282, %v2322
        %v2324 = vpop.f32.mrb[0].mxu0
        %v2325 = vpop.f32.mrb[0].mxu0
        %v2326 = vadd.f32 %v2285, %v2325
        %v2327 = vpop.f32.mrb[0].mxu0
        %2328 = vdwg.mxu0
        %2329 = vmatprep.subr.bf16.mxu0 0
        %2330 = vmatpush1.bf16.msra.mxu0 %v1720
        %2331 = vmatprep.subr.bf16.mxu0 0
        %2332 = vmatpush1.bf16.msra.mxu0 %v1721
        %2333 = vmatprep.subr.bf16.mxu0 0
        %2334 = vmatpush1.bf16.msra.mxu0 %v1722
        %2335 = vmatprep.subr.bf16.mxu0 0
        %2336 = vmatpush1.bf16.msra.mxu0 %v1723
        %2337 = vmatprep.subr.bf16.mxu0 0
        %2338 = vmatpush1.bf16.msra.mxu0 %v1724
        %2339 = vmatprep.subr.bf16.mxu0 0
        %2340 = vmatpush1.bf16.msra.mxu0 %v1725
        %2341 = vmatprep.subr.bf16.mxu0 0
        %2342 = vmatpush1.bf16.msra.mxu0 %v1726
        %2343 = vmatprep.subr.bf16.mxu0 0
        %2344 = vmatpush1.bf16.msra.mxu0 %v1727
        %2345 = vmatprep.subr.bf16.mxu0 0
        %2346 = vmatpush1.bf16.msra.mxu0 %v1728
        %2347 = vmatprep.subr.bf16.mxu0 0
        %2348 = vmatpush1.bf16.msra.mxu0 %v1729
        %2349 = vmatprep.subr.bf16.mxu0 0
        %2350 = vmatpush1.bf16.msra.mxu0 %v1730
        %2351 = vmatprep.subr.bf16.mxu0 0
        %2352 = vmatpush1.bf16.msra.mxu0 %v1731
        %2353 = vmatprep.subr.bf16.mxu0 0
        %2354 = vmatpush1.bf16.msra.mxu0 %v1732
        %2355 = vmatprep.subr.bf16.mxu0 0
        %2356 = vmatpush1.bf16.msra.mxu0 %v1733
        %2357 = vmatprep.subr.bf16.mxu0 0
        %2358 = vmatpush1.bf16.msra.mxu0 %v1734
        %2359 = vmatprep.subr.bf16.mxu0 0
        %2360 = vmatpush1.bf16.msra.mxu0 %v1735
        %2361 = vmatprep.mubr.bf16.mxu0 %v412
        %2362 = vmatmul.mubr.bf16.gmra.mrb[0].mxu0 %v411
        %v2363 = vpop.f32.mrb[0].mxu0
        %v2364 = vadd.f32 %v2323, %v2363
        %v2365 = vpop.f32.mrb[0].mxu0
        %v2366 = vpop.f32.mrb[0].mxu0
        %v2367 = vadd.f32 %v2326, %v2366
        %v2368 = vpop.f32.mrb[0].mxu0
        %2369 = vdwg.mxu0
        %2370 = vmatprep.subr.bf16.mxu0 0
        %2371 = vmatpush1.bf16.msra.mxu0 %v1736
        %2372 = vmatprep.subr.bf16.mxu0 0
        %2373 = vmatpush1.bf16.msra.mxu0 %v1737
        %2374 = vmatprep.subr.bf16.mxu0 0
        %2375 = vmatpush1.bf16.msra.mxu0 %v1738
        %2376 = vmatprep.subr.bf16.mxu0 0
        %2377 = vmatpush1.bf16.msra.mxu0 %v1739
        %2378 = vmatprep.subr.bf16.mxu0 0
        %2379 = vmatpush1.bf16.msra.mxu0 %v1740
        %2380 = vmatprep.subr.bf16.mxu0 0
        %2381 = vmatpush1.bf16.msra.mxu0 %v1741
        %2382 = vmatprep.subr.bf16.mxu0 0
        %2383 = vmatpush1.bf16.msra.mxu0 %v1742
        %2384 = vmatprep.subr.bf16.mxu0 0
        %2385 = vmatpush1.bf16.msra.mxu0 %v1743
        %2386 = vmatprep.subr.bf16.mxu0 0
        %2387 = vmatpush1.bf16.msra.mxu0 %v1744
        %2388 = vmatprep.subr.bf16.mxu0 0
        %2389 = vmatpush1.bf16.msra.mxu0 %v1745
        %2390 = vmatprep.subr.bf16.mxu0 0
        %2391 = vmatpush1.bf16.msra.mxu0 %v1746
        %2392 = vmatprep.subr.bf16.mxu0 0
        %2393 = vmatpush1.bf16.msra.mxu0 %v1747
        %2394 = vmatprep.subr.bf16.mxu0 0
        %2395 = vmatpush1.bf16.msra.mxu0 %v1748
        %2396 = vmatprep.subr.bf16.mxu0 0
        %2397 = vmatpush1.bf16.msra.mxu0 %v1749
        %2398 = vmatprep.subr.bf16.mxu0 0
        %2399 = vmatpush1.bf16.msra.mxu0 %v1750
        %2400 = vmatprep.subr.bf16.mxu0 0
        %2401 = vmatpush1.bf16.msra.mxu0 %v1751
        %2402 = vmatprep.mubr.bf16.mxu0 %v414
        %2403 = vmatmul.mubr.bf16.gmra.mrb[0].mxu0 %v413
        %v2404 = vpop.f32.mrb[0].mxu0
        %v2405 = vadd.f32 %v2364, %v2404
        %v2406 = vpop.f32.mrb[0].mxu0
        %v2407 = vpop.f32.mrb[0].mxu0
        %v2408 = vadd.f32 %v2367, %v2407
        %v2409 = vpop.f32.mrb[0].mxu0
        %2410 = vdwg.mxu0
        %2411 = vmatprep.subr.bf16.mxu0 0
        %2412 = vmatpush1.bf16.msra.mxu0 %v1752
        %2413 = vmatprep.subr.bf16.mxu0 0
        %2414 = vmatpush1.bf16.msra.mxu0 %v1753
        %2415 = vmatprep.subr.bf16.mxu0 0
        %2416 = vmatpush1.bf16.msra.mxu0 %v1754
        %2417 = vmatprep.subr.bf16.mxu0 0
        %2418 = vmatpush1.bf16.msra.mxu0 %v1755
        %2419 = vmatprep.subr.bf16.mxu0 0
        %2420 = vmatpush1.bf16.msra.mxu0 %v1756
        %2421 = vmatprep.subr.bf16.mxu0 0
        %2422 = vmatpush1.bf16.msra.mxu0 %v1757
        %2423 = vmatprep.subr.bf16.mxu0 0
        %2424 = vmatpush1.bf16.msra.mxu0 %v1758
        %2425 = vmatprep.subr.bf16.mxu0 0
        %2426 = vmatpush1.bf16.msra.mxu0 %v1759
        %2427 = vmatprep.subr.bf16.mxu0 0
        %2428 = vmatpush1.bf16.msra.mxu0 %v1760
        %2429 = vmatprep.subr.bf16.mxu0 0
        %2430 = vmatpush1.bf16.msra.mxu0 %v1761
        %2431 = vmatprep.subr.bf16.mxu0 0
        %2432 = vmatpush1.bf16.msra.mxu0 %v1762
        %2433 = vmatprep.subr.bf16.mxu0 0
        %2434 = vmatpush1.bf16.msra.mxu0 %v1763
        %2435 = vmatprep.subr.bf16.mxu0 0
        %2436 = vmatpush1.bf16.msra.mxu0 %v1764
        %2437 = vmatprep.subr.bf16.mxu0 0
        %2438 = vmatpush1.bf16.msra.mxu0 %v1765
        %2439 = vmatprep.subr.bf16.mxu0 0
        %2440 = vmatpush1.bf16.msra.mxu0 %v1766
        %2441 = vmatprep.subr.bf16.mxu0 0
        %2442 = vmatpush1.bf16.msra.mxu0 %v1767
        %2443 = vmatprep.mubr.bf16.mxu0 %v416
        %2444 = vmatmul.mubr.bf16.gmra.mrb[0].mxu0 %v415
        %v2445 = vpop.f32.mrb[0].mxu0
        %v2446 = vadd.f32 %v2405, %v2445
        %v2447 = vpop.f32.mrb[0].mxu0
        %v2448 = vpop.f32.mrb[0].mxu0
        %v2449 = vadd.f32 %v2408, %v2448
        %v2450 = vpop.f32.mrb[0].mxu0
        %2451 = vdwg.mxu0
        %v2452 = vmax.f32 %v2446, 0.0
        %v2453 = vmax.f32 %v2449, 0.0
        %v2454 = vpack.c.bf16 %v2453, %v2452
        %v2455 = vld [vmem:[#allocation7] sm:$0xf]
        %v2456 = vld [vmem:[#allocation7 + $0x4] sm:$0xf]
        %v2457 = vld [vmem:[#allocation7 + $0x8] sm:$0xf]
        %v2458 = vld [vmem:[#allocation7 + $0xc] sm:$0xf]
        %v2459 = vld [vmem:[#allocation7 + $0x10] sm:$0xf]
        %v2460 = vld [vmem:[#allocation7 + $0x14] sm:$0xf]
        %v2461 = vld [vmem:[#allocation7 + $0x18] sm:$0xf]
        %v2462 = vld [vmem:[#allocation7 + $0x1c] sm:$0xf]
        %v2463 = vld [vmem:[#allocation7 + $0x20] sm:$0xf]
        %v2464 = vld [vmem:[#allocation7 + $0x24] sm:$0xf]
        %v2465 = vld [vmem:[#allocation7 + $0x28] sm:$0xf]
        %v2466 = vld [vmem:[#allocation7 + $0x2c] sm:$0xf]
        %v2467 = vld [vmem:[#allocation7 + $0x30] sm:$0xf]
        %v2468 = vld [vmem:[#allocation7 + $0x34] sm:$0xf]
        %v2469 = vld [vmem:[#allocation7 + $0x38] sm:$0xf]
        %v2470 = vld [vmem:[#allocation7 + $0x3c] sm:$0xf]
        %v2471 = vld [vmem:[%s4] sm:$0x1]
        %v2473 = vlaneseq
        %v2474 = vshrl.u32 %v2473, 7
        %v2475 = vsub.s32 0, %v2474
        %v2476 = vrot.slane %v2471, %v2475
        %v2494 = vunpack.c.l.b16 %v2455
        %v2495 = vunpack.c.l.b16 %v2456
        %v2496 = vunpack.c.l.b16 %v2457
        %v2497 = vunpack.c.l.b16 %v2458
        %v2498 = vunpack.c.l.b16 %v2459
        %v2499 = vunpack.c.l.b16 %v2460
        %v2500 = vunpack.c.l.b16 %v2461
        %v2501 = vunpack.c.l.b16 %v2462
        %v2502 = vunpack.c.l.b16 %v2463
        %v2503 = vunpack.c.l.b16 %v2464
        %v2504 = vunpack.c.l.b16 %v2465
        %v2505 = vunpack.c.l.b16 %v2466
        %v2506 = vunpack.c.l.b16 %v2467
        %v2507 = vunpack.c.l.b16 %v2468
        %v2508 = vunpack.c.l.b16 %v2469
        %v2509 = vunpack.c.l.b16 %v2470
        %v2510 = vpack.c.b16 %v2495, %v2494
        %v2511 = vpack.c.b16 %v2497, %v2496
        %v2512 = vpack.c.b16 %v2499, %v2498
        %v2513 = vpack.c.b16 %v2501, %v2500
        %v2514 = vpack.c.b16 %v2503, %v2502
        %v2515 = vpack.c.b16 %v2505, %v2504
        %v2516 = vpack.c.b16 %v2507, %v2506
        %v2517 = vpack.c.b16 %v2509, %v2508
        %2526 = vmatprep.subr.bf16.mxu0 0
        %2527 = vmatpush1.bf16.msra.mxu0 %v2510
        %2528 = vmatprep.subr.bf16.mxu0 0
        %2529 = vmatpush1.bf16.msra.mxu0 %v2511
        %2530 = vmatprep.subr.bf16.mxu0 0
        %2531 = vmatpush1.bf16.msra.mxu0 %v2512
        %2532 = vmatprep.subr.bf16.mxu0 0
        %2533 = vmatpush1.bf16.msra.mxu0 %v2513
        %2534 = vmatprep.subr.bf16.mxu0 0
        %2535 = vmatpush1.bf16.msra.mxu0 %v2514
        %2536 = vmatprep.subr.bf16.mxu0 0
        %2537 = vmatpush1.bf16.msra.mxu0 %v2515
        %2538 = vmatprep.subr.bf16.mxu0 0
        %2539 = vmatpush1.bf16.msra.mxu0 %v2516
        %2540 = vmatprep.subr.bf16.mxu0 0
        %2541 = vmatpush1.bf16.msra.mxu0 %v2517
        %2542 = vmatprep.subr.bf16.mxu0 0
        %2543 = vmatpush1.bf16.msra.mxu0 0
        %2544 = vmatprep.subr.bf16.mxu0 0
        %2545 = vmatpush1.bf16.msra.mxu0 0
        %2546 = vmatprep.subr.bf16.mxu0 0
        %2547 = vmatpush1.bf16.msra.mxu0 0
        %2548 = vmatprep.subr.bf16.mxu0 0
        %2549 = vmatpush1.bf16.msra.mxu0 0
        %2550 = vmatprep.subr.bf16.mxu0 0
        %2551 = vmatpush1.bf16.msra.mxu0 0
        %2552 = vmatprep.subr.bf16.mxu0 0
        %2553 = vmatpush1.bf16.msra.mxu0 0
        %2554 = vmatprep.subr.bf16.mxu0 0
        %2555 = vmatpush1.bf16.msra.mxu0 0
        %2556 = vmatprep.subr.bf16.mxu0 0
        %2557 = vmatpush1.bf16.msra.mxu0 0
        %2558 = vmatprep.mubr.bf16.mxu0 0
        %2559 = vmatmul.mubr.bf16.gmra.mrb[0].mxu0 %v2454
        %v2560 = vpop.f32.mrb[0].mxu0
        %v2561 = vadd.f32 %v2476, %v2560
        %v2562 = vpop.f32.mrb[0].mxu0
        %v2563 = vpop.f32.mrb[0].mxu0
        %v2564 = vadd.f32 %v2476, %v2563
        %v2565 = vpop.f32.mrb[0].mxu0
        %2566 = vdwg.mxu0
        %v2567 = vmax.f32 %v2561, 0.0
        %v2568 = vmax.f32 %v2564, 0.0
        %v2569 = vpack.c.bf16 %v2568, %v2567
        %v2570 = vld [vmem:[#allocation8] sm:$0xf]
        %v2571 = vld [vmem:[#allocation8 + $0x4] sm:$0xf]
        %v2572 = vld [vmem:[#allocation8 + $0x8] sm:$0xf]
        %v2573 = vld [vmem:[#allocation8 + $0xc] sm:$0xf]
        %v2574 = vld [vmem:[#allocation8 + $0x10] sm:$0xf]
        %v2575 = vld [vmem:[#allocation8 + $0x14] sm:$0xf]
        %v2576 = vld [vmem:[#allocation8 + $0x18] sm:$0xf]
        %v2577 = vld [vmem:[#allocation8 + $0x1c] sm:$0xf]
        %v2578 = vld [vmem:[#allocation8 + $0x20] sm:$0xf]
        %v2579 = vld [vmem:[#allocation8 + $0x24] sm:$0xf]
        %v2580 = vld [vmem:[#allocation8 + $0x28] sm:$0xf]
        %v2581 = vld [vmem:[#allocation8 + $0x2c] sm:$0xf]
        %v2582 = vld [vmem:[#allocation8 + $0x30] sm:$0xf]
        %v2583 = vld [vmem:[#allocation8 + $0x34] sm:$0xf]
        %v2584 = vld [vmem:[#allocation8 + $0x38] sm:$0xf]
        %v2585 = vld [vmem:[#allocation8 + $0x3c] sm:$0xf]
        %v2586 = vld [vmem:[%s6] sm:$0x1]
        %v2588 = vlaneseq
        %v2589 = vshrl.u32 %v2588, 7
        %v2590 = vsub.s32 0, %v2589
        %v2591 = vrot.slane %v2586, %v2590
        %v2609 = vunpack.c.l.b16 %v2570
        %v2610 = vunpack.c.l.b16 %v2571
        %v2611 = vunpack.c.l.b16 %v2572
        %v2612 = vunpack.c.l.b16 %v2573
        %v2613 = vunpack.c.l.b16 %v2574
        %v2614 = vunpack.c.l.b16 %v2575
        %v2615 = vunpack.c.l.b16 %v2576
        %v2616 = vunpack.c.l.b16 %v2577
        %v2617 = vunpack.c.l.b16 %v2578
        %v2618 = vunpack.c.l.b16 %v2579
        %v2619 = vunpack.c.l.b16 %v2580
        %v2620 = vunpack.c.l.b16 %v2581
        %v2621 = vunpack.c.l.b16 %v2582
        %v2622 = vunpack.c.l.b16 %v2583
        %v2623 = vunpack.c.l.b16 %v2584
        %v2624 = vunpack.c.l.b16 %v2585
        %v2625 = vpack.c.b16 %v2610, %v2609
        %v2626 = vpack.c.b16 %v2612, %v2611
        %v2627 = vpack.c.b16 %v2614, %v2613
        %v2628 = vpack.c.b16 %v2616, %v2615
        %v2629 = vpack.c.b16 %v2618, %v2617
        %v2630 = vpack.c.b16 %v2620, %v2619
        %v2631 = vpack.c.b16 %v2622, %v2621
        %v2632 = vpack.c.b16 %v2624, %v2623
        %2641 = vmatprep.subr.bf16.mxu0 0
        %2642 = vmatpush1.bf16.msra.mxu0 %v2625
        %2643 = vmatprep.subr.bf16.mxu0 0
        %2644 = vmatpush1.bf16.msra.mxu0 %v2626
        %2645 = vmatprep.subr.bf16.mxu0 0
        %2646 = vmatpush1.bf16.msra.mxu0 %v2627
        %2647 = vmatprep.subr.bf16.mxu0 0
        %2648 = vmatpush1.bf16.msra.mxu0 %v2628
        %2649 = vmatprep.subr.bf16.mxu0 0
        %2650 = vmatpush1.bf16.msra.mxu0 %v2629
        %2651 = vmatprep.subr.bf16.mxu0 0
        %2652 = vmatpush1.bf16.msra.mxu0 %v2630
        %2653 = vmatprep.subr.bf16.mxu0 0
        %2654 = vmatpush1.bf16.msra.mxu0 %v2631
        %2655 = vmatprep.subr.bf16.mxu0 0
        %2656 = vmatpush1.bf16.msra.mxu0 %v2632
        %2657 = vmatprep.subr.bf16.mxu0 0
        %2658 = vmatpush1.bf16.msra.mxu0 0
        %2659 = vmatprep.subr.bf16.mxu0 0
        %2660 = vmatpush1.bf16.msra.mxu0 0
        %2661 = vmatprep.subr.bf16.mxu0 0
        %2662 = vmatpush1.bf16.msra.mxu0 0
        %2663 = vmatprep.subr.bf16.mxu0 0
        %2664 = vmatpush1.bf16.msra.mxu0 0
        %2665 = vmatprep.subr.bf16.mxu0 0
        %2666 = vmatpush1.bf16.msra.mxu0 0
        %2667 = vmatprep.subr.bf16.mxu0 0
        %2668 = vmatpush1.bf16.msra.mxu0 0
        %2669 = vmatprep.subr.bf16.mxu0 0
        %2670 = vmatpush1.bf16.msra.mxu0 0
        %2671 = vmatprep.subr.bf16.mxu0 0
        %2672 = vmatpush1.bf16.msra.mxu0 0
        %2673 = vmatprep.mubr.bf16.mxu0 0
        %2674 = vmatmul.mubr.bf16.gmra.mrb[0].mxu0 %v2569
        %v2675 = vpop.f32.mrb[0].mxu0
        %v2676 = vadd.f32 %v2591, %v2675
        %v2677 = vpop.f32.mrb[0].mxu0
        %v2678 = vpop.f32.mrb[0].mxu0
        %v2679 = vadd.f32 %v2591, %v2678
        %v2680 = vpop.f32.mrb[0].mxu0
        %2681 = vdwg.mxu0
        %2682 = vst [vmem:[%s341] sm:$0xff] %v2676
        %2683 = vst [vmem:[%s341 + $0x8] sm:$0xff] %v2679
        %s2684 = sand.u32 %s186, 1
        %s2685 = scalar_lea.sflag [#allocation4], %s2684
        %s2686 = sand.u32 %s186, 1
        %s2687 = smul.addr %s2686, 16
        %s2688 = scalar_lea.vmem [#allocation10], %s2687
        // Predicated region
        $region65: #{tpu_custom_call.1} parent=47 // pred_check
          %p2689 = pneg %p196
        $region66: #{tpu_custom_call.1} parent=47 // pred_check_branch
          %2691 = sbr.rel (%p2689) target = $region68
        $region67: #{tpu_custom_call.1} parent=47 // pred_region
          %s2692 = smul.u32 2, %s26
          %s2694 = ssub.s32 256, 256
          %2695 = vsyncadd %s2685, %s2694
          %s2696 = smul.addr %s2692, 128
          %s2697 = scalar_lea.hbm %s7, %s2696
          %s2698 = sshll.u32 %s2688, 4
          %s2699 = int_to_ptr.vmem [resolvable:$true] %s2698
          %2704 = dma.vmem_to_hbm [thread:$0]  %s2699, 256, %s2697, %s2685, 128, 128, 8
        $region68: #{tpu_custom_call.1} parent=47 // pred_fallthru
          _
      $region48: #{tpu_custom_call.1} parent=5 // pred_fallthru
        _
      %p2705 = scmp.le.s32.totalorder 2, %s21
      // Predicated region
      $region69: #{tpu_custom_call.1} parent=5 // pred_check
        %p2706 = pneg %p2705
      $region70: #{tpu_custom_call.1} parent=5 // pred_check_branch
        %2708 = sbr.rel (%p2706) target = $region72
      $region71: #{tpu_custom_call.1} parent=5 // pred_region
        %s2709 = ssub.s32 %s21, 2
        // Predicated region
        $region73: #{tpu_custom_call.1} parent=71 // pred_check
          %p2710 = pneg %p202
        $region74: #{tpu_custom_call.1} parent=71 // pred_check_branch
          %2712 = sbr.rel (%p2710) target = $region76
        $region75: #{tpu_custom_call.1} parent=71 // pred_region
          %s2713 = sand.u32 %s187, 1
          %s2714 = scalar_lea.sflag [#allocation4], %s2713
          %s2715 = sand.u32 %s187, 1
          %s2716 = smul.addr %s2715, 16
          %s2717 = scalar_lea.vmem [#allocation10], %s2716
          %2718 = dma.done %s2714, 256
        $region76: #{tpu_custom_call.1} parent=71 // pred_fallthru
          _
      $region72: #{tpu_custom_call.1} parent=5 // pred_fallthru
        _
    $region6: #{tpu_custom_call.1} parent=1 // loop_footer
      %s25 = sadd.s32 1, %s21
    $region7: #{tpu_custom_call.1} parent=1 // loop_footer_branch
      %20 = sbr.rel target = $region3
    $region8: #{tpu_custom_call.1} parent=1 // loop_exit
      _
    %2719 = vsyncpa [#allocation3], 1
    %s2720 = scalar_lea.sflag [#allocation3], 1
    %2721 = vsyncpa %s2720, 1
    %2722 = vsyncpa [#allocation6], 1
    %2723 = vsyncpa [#allocation9], 1
    %2724 = vsyncpa [#allocation4], 1
    %s2725 = scalar_lea.sflag [#allocation4], 1
    %2726 = vsyncpa %s2725, 1

</llo_original>
